<compile_context>
chip_gen: v5e
topology: v5e:2x2
jax: 0.10.0
libtpu: 0.0.40
codegen_flags: <defaults>
</compile_context>

<pallas_src>
import functools

import jax
import jax.numpy as jnp
from jax.experimental import pallas as pl
from jax.experimental.pallas import tpu as pltpu


def _round_up(n, m):
    return ((n + m - 1) // m) * m


def _probe_buffered():
    """One-time feature check for pl.Buffered / BlockSpec(pipeline_mode=...)."""
    try:
        mode = pl.Buffered(1)
        pl.BlockSpec((8, 128), lambda i: (0, 0), pipeline_mode=mode)
        return True
    except Exception:
        return False


_HAS_BUFFERED = _probe_buffered()


def _vmem_capacity_bytes():
    try:
        return int(pltpu.get_tpu_info().vmem_capacity_bytes)
    except Exception:
        return 64 << 20  # conservative fallback (v7x per-TC size)


def _estimate_vmem_bytes(tile_n, C, out_p, act_itm, w_itm, weight_bufs):
    # Double-buffered streamed tiles (x, c in; out).
    streamed = 2 * tile_n * (2 * C + out_p) * act_itm
    # Resident weights / biases (single-buffered when Buffered(1) is available).
    weights = weight_bufs * ((2 * C * C + C * out_p) * w_itm + (2 * C + out_p) * 4)
    # Kernel-internal f32 temporaries: x/c f32 copies, silu_c, shift, scale,
    # xc, x_norm, x_mod (~8 x tile_n x C) plus the f32 matmul accumulator.
    temps = tile_n * (8 * C + 2 * out_p) * 4
    return streamed + weights + temps + (4 << 20)  # slack for Mosaic scratch


def final_layer_kernel(x_ref, c_ref,
                       w_shift_ref, b_shift_ref,
                       w_scale_ref, b_scale_ref,
                       w_lin_ref, b_lin_ref,
                       o_ref, *, eps):
    mm_dtype = w_shift_ref.dtype  # MXU operand dtype (bf16 or f32)

    # Elementwise math and LayerNorm statistics in f32.
    x = x_ref[...].astype(jnp.float32)          # (tm, C)
    c = c_ref[...].astype(jnp.float32)          # (tm, C)

    # adaLN_modulation: SiLU then Linear(C -> 2C) as two aligned (C, C) dots.
    silu_c = (c * jax.nn.sigmoid(c)).astype(mm_dtype)
    shift = jnp.dot(silu_c, w_shift_ref[...],
                    preferred_element_type=jnp.float32) + b_shift_ref[...]
    scale = jnp.dot(silu_c, w_scale_ref[...],
                    preferred_element_type=jnp.float32) + b_scale_ref[...]

    # LayerNorm (no affine), biased variance, eps inside rsqrt.
    mean = jnp.mean(x, axis=-1, keepdims=True)
    xc = x - mean
    var = jnp.mean(xc * xc, axis=-1, keepdims=True)
    x_norm = xc * jax.lax.rsqrt(var + eps)

    # modulate + cast to the MXU operand dtype.  On the bf16 path the
    # elementwise chain uses the bf16 VPU (v6e/v7x) and halves scratch size.
    if mm_dtype == jnp.bfloat16:
        x_mod = (x_norm.astype(mm_dtype) * (1.0 + scale).astype(mm_dtype)
                 + shift.astype(mm_dtype))
    else:
        x_mod = (x_norm * (1.0 + scale) + shift).astype(mm_dtype)

    # final linear C -> out_channels (lane-padded to a multiple of 128)
    out = jnp.dot(x_mod, w_lin_ref[...],
                  preferred_element_type=jnp.float32) + b_lin_ref[...]
    o_ref[...] = out.astype(o_ref.dtype)


def final_layer(x, c, w_ada, b_ada, w_lin, b_lin, *,
                eps=1e-6, tile_n=None, matmul_dtype=None,
                input_buffer_count=None):
    """x, c: (N, C); w_ada: (C, 2C) pre-transposed, columns = [shift | scale];
    b_ada: (1, 2C); w_lin: (C, out); b_lin: (1, out). Returns (N, out)."""
    N, C = x.shape
    two_c = w_ada.shape[1]
    out_c = w_lin.shape[1]
    assert c.shape == (N, C) and two_c == 2 * C and b_ada.shape == (1, two_c)
    assert w_lin.shape == (C, out_c) and b_lin.shape == (1, out_c)

    if matmul_dtype is None:
        # NOTE(v5e): pass matmul_dtype=jnp.bfloat16 explicitly for f32 inputs
        # when MXU-bound; v5e's MXU peak is bf16-only (accumulation stays f32).
        matmul_dtype = jnp.bfloat16 if x.dtype == jnp.bfloat16 else jnp.float32

    act_itm = jnp.dtype(x.dtype).itemsize
    w_itm = jnp.dtype(matmul_dtype).itemsize
    out_p = _round_up(out_c, 128)
    weight_bufs = 1 if _HAS_BUFFERED else 2

    vmem_cap = _vmem_capacity_bytes()
    vmem_budget_cap = max(16 << 20, vmem_cap - (8 << 20))  # Mosaic headroom

    # --- tile selection: biggest row tile whose estimated VMEM use fits. -----
    if tile_n is None:
        if N >= 4096:
            candidates = [1024, 512, 256]
        elif N >= 256:
            candidates = [min(512, _round_up(N, 256)), 256]
        else:
            candidates = [_round_up(N, 8)]
        tile_n = candidates[-1]
        for cand in candidates:
            if _estimate_vmem_bytes(cand, C, out_p, act_itm, w_itm,
                                    weight_bufs) <= vmem_budget_cap:
                tile_n = cand
                break
    tile_n = max(8, min(tile_n, _round_up(N, 8)))
    assert tile_n % 8 == 0, "tile_n must be sublane aligned (multiple of 8)"

    # Keep small grids even so v7x's two TensorCores stay balanced.
    grid_n = pl.cdiv(N, tile_n)
    if (1 < grid_n <= 8 and grid_n % 2 == 1
            and tile_n >= 256 and (tile_n // 2) % 8 == 0):
        tile_n //= 2
        grid_n = pl.cdiv(N, tile_n)

    # Lane-dense output: pad out_c up to a multiple of 128, slice afterwards.
    if out_p != out_c:
        w_lin = jnp.pad(w_lin, ((0, 0), (0, out_p - out_c)))
        b_lin = jnp.pad(b_lin, ((0, 0), (0, out_p - out_c)))

    # Pre-split adaLN weight: kernel never slices a (tm, 2C) intermediate.
    w_shift, w_scale = w_ada[:, :C], w_ada[:, C:]
    b_shift, b_scale = b_ada[:, :C], b_ada[:, C:]

    # MXU operands in matmul_dtype; biases stay f32 (added to f32 accumulator).
    w_shift = w_shift.astype(matmul_dtype)
    w_scale = w_scale.astype(matmul_dtype)
    w_lin = w_lin.astype(matmul_dtype)
    b_shift = b_shift.astype(jnp.float32)
    b_scale = b_scale.astype(jnp.float32)
    b_lin = b_lin.astype(jnp.float32)

    vmem_bytes = _estimate_vmem_bytes(tile_n, C, out_p, act_itm, w_itm,
                                      weight_bufs)
    vmem_bytes = int(min(max(vmem_bytes, 16 << 20), vmem_budget_cap))

    kernel = functools.partial(final_layer_kernel, eps=eps)

    def act_spec(shape, imap):
        if input_buffer_count is not None and _HAS_BUFFERED:
            return pl.BlockSpec(shape, imap,
                                pipeline_mode=pl.Buffered(input_buffer_count))
        return pl.BlockSpec(shape, imap)

    def weight_spec(shape):
        if _HAS_BUFFERED:
            # Grid-invariant weights: single-buffered saves VMEM (esp. v7x).
            return pl.BlockSpec(shape, lambda i: (0, 0),
                                pipeline_mode=pl.Buffered(1))
        return pl.BlockSpec(shape, lambda i: (0, 0))

    out = pl.pallas_call(
        kernel,
        out_shape=jax.ShapeDtypeStruct((N, out_p), x.dtype),
        grid_spec=pltpu.PrefetchScalarGridSpec(
            num_scalar_prefetch=0,
            grid=(grid_n,),
            in_specs=[
                act_spec((tile_n, C), lambda i: (i, 0)),   # x rows
                act_spec((tile_n, C), lambda i: (i, 0)),   # c rows
                weight_spec((C, C)),        # w_shift
                weight_spec((1, C)),        # b_shift
                weight_spec((C, C)),        # w_scale
                weight_spec((1, C)),        # b_scale
                weight_spec((C, out_p)),    # w_lin (lane padded)
                weight_spec((1, out_p)),    # b_lin (lane padded)
            ],
            out_specs=pl.BlockSpec((tile_n, out_p), lambda i: (i, 0)),
        ),
        compiler_params=pltpu.CompilerParams(
            dimension_semantics=("parallel",),
            vmem_limit_bytes=vmem_bytes),
    )(x, c, w_shift, b_shift, w_scale, b_scale, w_lin, b_lin)

    return out[:, :out_c] if out_p != out_c else out


def reference(x, c, w_ada, b_ada, w_lin, b_lin, eps=1e-6):
    x = x.astype(jnp.float32)
    c = c.astype(jnp.float32)
    silu_c = c * jax.nn.sigmoid(c)
    ada = silu_c @ w_ada + b_ada
    C = x.shape[-1]
    shift, scale = ada[:, :C], ada[:, C:]
    mean = jnp.mean(x, axis=-1, keepdims=True)
    var = jnp.mean((x - mean) ** 2, axis=-1, keepdims=True)
    xn = (x - mean) / jnp.sqrt(var + eps)
    xm = xn * (1 + scale) + shift
    return xm @ w_lin + b_lin


if __name__ == "__main__":
    key = jax.random.PRNGKey(0)
    model_channels = 32
    out_channels = 16
    N = 300  # not tile-aligned -> exercises the ragged-last-block path

    kx, kc, kwa, kba, kwl, kbl = jax.random.split(key, 6)
    x = jax.random.normal(kx, (N, model_channels), dtype=jnp.float32)
    c = jax.random.normal(kc, (N, model_channels), dtype=jnp.float32)

    # nn.Linear parameters, stored pre-transposed (in_features, out_features).
    w_ada = 0.02 * jax.random.normal(
        kwa, (model_channels, 2 * model_channels), dtype=jnp.float32)
    b_ada = 0.01 * jax.random.normal(
        kba, (1, 2 * model_channels), dtype=jnp.float32)
    w_lin = 0.02 * jax.random.normal(
        kwl, (model_channels, out_channels), dtype=jnp.float32)
    b_lin = 0.01 * jax.random.normal(
        kbl, (1, out_channels), dtype=jnp.float32)

    ref = reference(x, c, w_ada, b_ada, w_lin, b_lin)

    # Default tile policy (single tile here, no host-side padding).
    out = jax.block_until_ready(final_layer(x, c, w_ada, b_ada, w_lin, b_lin))
    assert out.shape == (N, out_channels)
    err = jnp.max(jnp.abs(out - ref))
    assert jnp.allclose(out, ref, atol=1e-4, rtol=1e-4), f"f32 max err {err}"

    # Forced small tile -> multi-step grid with a masked ragged last block.
    out_t = jax.block_until_ready(
        final_layer(x, c, w_ada, b_ada, w_lin, b_lin, tile_n=128))
    err_t = jnp.max(jnp.abs(out_t - ref))
    assert jnp.allclose(out_t, ref, atol=1e-4, rtol=1e-4), f"tiled max err {err_t}"

    # bf16 activation path: bf16 MXU operands + bf16 modulate, f32 stats/accum.
    out_bf16 = jax.block_until_ready(
        final_layer(x.astype(jnp.bfloat16), c.astype(jnp.bfloat16),
                    w_ada, b_ada, w_lin, b_lin, tile_n=128)).astype(jnp.float32)
    err_bf16 = jnp.max(jnp.abs(out_bf16 - ref))
    assert jnp.allclose(out_bf16, ref, atol=5e-2, rtol=5e-2), (
        f"bf16 max err {err_bf16}")

    print("KERNEL_OK")
</pallas_src>

<mosaic_0001>
module attributes {stable_mosaic.version = 11 : i64} {
  func.func @final_layer_kernel(%arg0: i32, %arg1: memref<304x32xf32, #tpu.memory_space<vmem>>, %arg2: memref<304x32xf32, #tpu.memory_space<vmem>>, %arg3: memref<32x32xf32, #tpu.memory_space<vmem>>, %arg4: memref<1x32xf32, #tpu.memory_space<vmem>>, %arg5: memref<32x32xf32, #tpu.memory_space<vmem>>, %arg6: memref<1x32xf32, #tpu.memory_space<vmem>>, %arg7: memref<32x128xf32, #tpu.memory_space<vmem>>, %arg8: memref<1x128xf32, #tpu.memory_space<vmem>>, %arg9: memref<304x128xf32, #tpu.memory_space<vmem>>) attributes {dimension_semantics = [#tpu.dimension_semantics<parallel>], iteration_bounds = array<i64: 1>, scalar_prefetch = 0 : i64, scratch_operands = 0 : i64, tpu.core_type = #tpu.core_type<tc>, window_params = [{transform_indices = @transform_0, window_bounds = array<i64: 304, 32>}, {transform_indices = @transform_1, window_bounds = array<i64: 304, 32>}, {pipeline_mode = #tpu.pipeline_mode<synchronous>, transform_indices = @transform_2, window_bounds = array<i64: 32, 32>}, {pipeline_mode = #tpu.pipeline_mode<synchronous>, transform_indices = @transform_3, window_bounds = array<i64: 1, 32>}, {pipeline_mode = #tpu.pipeline_mode<synchronous>, transform_indices = @transform_4, window_bounds = array<i64: 32, 32>}, {pipeline_mode = #tpu.pipeline_mode<synchronous>, transform_indices = @transform_5, window_bounds = array<i64: 1, 32>}, {pipeline_mode = #tpu.pipeline_mode<synchronous>, transform_indices = @transform_6, window_bounds = array<i64: 32, 128>}, {pipeline_mode = #tpu.pipeline_mode<synchronous>, transform_indices = @transform_7, window_bounds = array<i64: 1, 128>}, {transform_indices = @transform_8, window_bounds = array<i64: 304, 128>}]} {
    %c0 = arith.constant 0 : index
    %c0_0 = arith.constant 0 : index
    %0 = vector.load %arg1[%c0, %c0_0] : memref<304x32xf32, #tpu.memory_space<vmem>>, vector<304x32xf32>
    %c0_1 = arith.constant 0 : index
    %c0_2 = arith.constant 0 : index
    %1 = vector.load %arg2[%c0_1, %c0_2] : memref<304x32xf32, #tpu.memory_space<vmem>>, vector<304x32xf32>
    %2 = arith.negf %1 : vector<304x32xf32>
    %3 = math.exp %2 : vector<304x32xf32>
    %cst = arith.constant 1.000000e+00 : f32
    %4 = vector.broadcast %cst : f32 to vector<304x32xf32>
    %5 = arith.addf %4, %3 : vector<304x32xf32>
    %6 = arith.divf %4, %5 : vector<304x32xf32>
    %7 = arith.mulf %1, %6 : vector<304x32xf32>
    %c0_3 = arith.constant 0 : index
    %c0_4 = arith.constant 0 : index
    %8 = vector.load %arg3[%c0_3, %c0_4] : memref<32x32xf32, #tpu.memory_space<vmem>>, vector<32x32xf32>
    %cst_5 = arith.constant dense<0.000000e+00> : vector<304x32xf32>
    %9 = tpu.matmul %7, %8, %cst_5 {dimension_numbers = #tpu.dot_dimension_numbers<[1], [0], [0], [1], [0, 0, 1, 1], [], []>} : vector<304x32xf32>, vector<32x32xf32>, vector<304x32xf32> -> vector<304x32xf32>
    %c0_6 = arith.constant 0 : index
    %c0_7 = arith.constant 0 : index
    %10 = vector.load %arg4[%c0_6, %c0_7] : memref<1x32xf32, #tpu.memory_space<vmem>>, vector<1x32xf32>
    %11 = vector.broadcast %10 : vector<1x32xf32> to vector<304x32xf32>
    %12 = arith.addf %9, %11 : vector<304x32xf32>
    %c0_8 = arith.constant 0 : index
    %c0_9 = arith.constant 0 : index
    %13 = vector.load %arg5[%c0_8, %c0_9] : memref<32x32xf32, #tpu.memory_space<vmem>>, vector<32x32xf32>
    %cst_10 = arith.constant dense<0.000000e+00> : vector<304x32xf32>
    %14 = tpu.matmul %7, %13, %cst_10 {dimension_numbers = #tpu.dot_dimension_numbers<[1], [0], [0], [1], [0, 0, 1, 1], [], []>} : vector<304x32xf32>, vector<32x32xf32>, vector<304x32xf32> -> vector<304x32xf32>
    %c0_11 = arith.constant 0 : index
    %c0_12 = arith.constant 0 : index
    %15 = vector.load %arg6[%c0_11, %c0_12] : memref<1x32xf32, #tpu.memory_space<vmem>>, vector<1x32xf32>
    %16 = vector.broadcast %15 : vector<1x32xf32> to vector<304x32xf32>
    %17 = arith.addf %14, %16 : vector<304x32xf32>
    %cst_13 = arith.constant dense<0.000000e+00> : vector<304xf32>
    %18 = vector.multi_reduction <add>, %0, %cst_13 [1] : vector<304x32xf32> to vector<304xf32>
    %19 = vector.shape_cast %18 : vector<304xf32> to vector<304x1xf32>
    %cst_14 = arith.constant 3.200000e+01 : f32
    %20 = vector.broadcast %cst_14 : f32 to vector<304x1xf32>
    %21 = arith.divf %19, %20 : vector<304x1xf32>
    %22 = vector.broadcast %21 : vector<304x1xf32> to vector<304x32xf32>
    %23 = arith.subf %0, %22 : vector<304x32xf32>
    %24 = arith.mulf %23, %23 : vector<304x32xf32>
    %cst_15 = arith.constant dense<0.000000e+00> : vector<304xf32>
    %25 = vector.multi_reduction <add>, %24, %cst_15 [1] : vector<304x32xf32> to vector<304xf32>
    %26 = vector.shape_cast %25 : vector<304xf32> to vector<304x1xf32>
    %cst_16 = arith.constant 3.200000e+01 : f32
    %27 = vector.broadcast %cst_16 : f32 to vector<304x1xf32>
    %28 = arith.divf %26, %27 : vector<304x1xf32>
    %cst_17 = arith.constant 9.99999997E-7 : f32
    %29 = vector.broadcast %cst_17 : f32 to vector<304x1xf32>
    %30 = arith.addf %28, %29 : vector<304x1xf32>
    %31 = math.rsqrt %30 : vector<304x1xf32>
    %32 = vector.broadcast %31 : vector<304x1xf32> to vector<304x32xf32>
    %33 = arith.mulf %23, %32 : vector<304x32xf32>
    %cst_18 = arith.constant 1.000000e+00 : f32
    %34 = vector.broadcast %cst_18 : f32 to vector<304x32xf32>
    %35 = arith.addf %34, %17 : vector<304x32xf32>
    %36 = arith.mulf %33, %35 : vector<304x32xf32>
    %37 = arith.addf %36, %12 : vector<304x32xf32>
    %c0_19 = arith.constant 0 : index
    %c0_20 = arith.constant 0 : index
    %38 = vector.load %arg7[%c0_19, %c0_20] : memref<32x128xf32, #tpu.memory_space<vmem>>, vector<32x128xf32>
    %cst_21 = arith.constant dense<0.000000e+00> : vector<304x128xf32>
    %39 = tpu.matmul %37, %38, %cst_21 {dimension_numbers = #tpu.dot_dimension_numbers<[1], [0], [0], [1], [0, 0, 1, 1], [], []>} : vector<304x32xf32>, vector<32x128xf32>, vector<304x128xf32> -> vector<304x128xf32>
    %c0_22 = arith.constant 0 : index
    %c0_23 = arith.constant 0 : index
    %40 = vector.load %arg8[%c0_22, %c0_23] : memref<1x128xf32, #tpu.memory_space<vmem>>, vector<1x128xf32>
    %41 = vector.broadcast %40 : vector<1x128xf32> to vector<304x128xf32>
    %42 = arith.addf %39, %41 : vector<304x128xf32>
    %c0_24 = arith.constant 0 : index
    %c0_25 = arith.constant 0 : index
    %43 = vector.load %arg9[%c0_24, %c0_25] : memref<304x128xf32, #tpu.memory_space<vmem>>, vector<304x128xf32>
    tpu.vector_store %arg9[%c0_24, %c0_25], %42 {strides = array<i32>} : memref<304x128xf32, #tpu.memory_space<vmem>>, vector<304x128xf32>,
    return
  }
  func.func @transform_0(%arg0: i32) -> (i32, i32) {
    %c0_i32 = arith.constant 0 : i32
    %c0_i32_0 = arith.constant 0 : i32
    return %arg0, %c0_i32 : i32, i32
  }
  func.func @transform_1(%arg0: i32) -> (i32, i32) {
    %c0_i32 = arith.constant 0 : i32
    %c0_i32_0 = arith.constant 0 : i32
    return %arg0, %c0_i32 : i32, i32
  }
  func.func @transform_2(%arg0: i32) -> (i32, i32) {
    %c0_i32 = arith.constant 0 : i32
    %c0_i32_0 = arith.constant 0 : i32
    %c0_i32_1 = arith.constant 0 : i32
    return %c0_i32, %c0_i32_0 : i32, i32
  }
  func.func @transform_3(%arg0: i32) -> (i32, i32) {
    %c0_i32 = arith.constant 0 : i32
    %c0_i32_0 = arith.constant 0 : i32
    %c0_i32_1 = arith.constant 0 : i32
    return %c0_i32, %c0_i32_0 : i32, i32
  }
  func.func @transform_4(%arg0: i32) -> (i32, i32) {
    %c0_i32 = arith.constant 0 : i32
    %c0_i32_0 = arith.constant 0 : i32
    %c0_i32_1 = arith.constant 0 : i32
    return %c0_i32, %c0_i32_0 : i32, i32
  }
  func.func @transform_5(%arg0: i32) -> (i32, i32) {
    %c0_i32 = arith.constant 0 : i32
    %c0_i32_0 = arith.constant 0 : i32
    %c0_i32_1 = arith.constant 0 : i32
    return %c0_i32, %c0_i32_0 : i32, i32
  }
  func.func @transform_6(%arg0: i32) -> (i32, i32) {
    %c0_i32 = arith.constant 0 : i32
    %c0_i32_0 = arith.constant 0 : i32
    %c0_i32_1 = arith.constant 0 : i32
    return %c0_i32, %c0_i32_0 : i32, i32
  }
  func.func @transform_7(%arg0: i32) -> (i32, i32) {
    %c0_i32 = arith.constant 0 : i32
    %c0_i32_0 = arith.constant 0 : i32
    %c0_i32_1 = arith.constant 0 : i32
    return %c0_i32, %c0_i32_0 : i32, i32
  }
  func.func @transform_8(%arg0: i32) -> (i32, i32) {
    %c0_i32 = arith.constant 0 : i32
    %c0_i32_0 = arith.constant 0 : i32
    return %arg0, %c0_i32 : i32, i32
  }
}

</mosaic_0001>

<llo_original>
// kernel: tpu_custom_call.1
$region0: #{tpu_custom_call.1}
  #allocation0 [shape = 'u32[]', space=smem, size = 0x4, offset = 0x4, fixed_abs, tag = 'smem constant byte address 0x4 - core index']
  #allocation1 [shape = 'u32[72,128]{1,0:T(1,128)}', space=vmem, size = 0x9000, scoped, tag = 'internal scratch']
  %s0 = inlined_call_operand.vmem [shape: f32[300,32], index: 0, kind: input, shape index: {}]
  %s1 = inlined_call_operand.vmem [shape: f32[300,32], index: 1, kind: input, shape index: {}]
  %s2 = inlined_call_operand.vmem [shape: f32[32,32], index: 2, kind: input, shape index: {}]
  %s3 = inlined_call_operand.vmem [shape: f32[1,32], index: 3, kind: input, shape index: {}]
  %s4 = inlined_call_operand.vmem [shape: f32[32,32], index: 4, kind: input, shape index: {}]
  %s5 = inlined_call_operand.vmem [shape: f32[1,32], index: 5, kind: input, shape index: {}]
  %s6 = inlined_call_operand.vmem [shape: f32[32,128], index: 6, kind: input, shape index: {}]
  %s7 = inlined_call_operand.vmem [shape: f32[1,128], index: 7, kind: input, shape index: {}]
  %s8 = inlined_call_operand.hbm [shape: f32[300,128], index: 8, kind: output, shape index: {}]
  %s9 = sld [smem:[#allocation0]]
  $region42: #{tpu_custom_call.1} parent=0
    _
  %s11 = ssub.s32 1, %s9
  %s12 = scalar_select 0, %s11, %s9
  $region1: #{tpu_custom_call.1} parent=0
    #allocation2 [shape = 'u8[155648]{0}', space=vmem, size = 0x26000, scoped, tag = 'output window, operand 0, single buffered']
    #allocation3 [shape = 's32[1]{0}', space=sflag, size = 0x4, scoped, tag = 'scoped memory for tpu_custom_call.1']
    %13 = vsyncpa [#allocation3], 0
    // Predicated region
    $region2: #{tpu_custom_call.1} parent=1 // pred_check
      _
    $region3: #{tpu_custom_call.1} parent=1 // pred_check_branch
      %15 = sbr.rel (0) target = $region5
    $region4: #{tpu_custom_call.1} parent=1 // pred_region
      _
    $region5: #{tpu_custom_call.1} parent=1 // pred_fallthru
      _
    // Predicated region
    $region6: #{tpu_custom_call.1} parent=1 // pred_check
      _
    $region7: #{tpu_custom_call.1} parent=1 // pred_check_branch
      %17 = sbr.rel (0) target = $region9
    $region8: #{tpu_custom_call.1} parent=1 // pred_region
      _
    $region9: #{tpu_custom_call.1} parent=1 // pred_fallthru
      _
    // Predicated region
    $region10: #{tpu_custom_call.1} parent=1 // pred_check
      _
    $region11: #{tpu_custom_call.1} parent=1 // pred_check_branch
      %19 = sbr.rel (0) target = $region13
    $region12: #{tpu_custom_call.1} parent=1 // pred_region
      _
    $region13: #{tpu_custom_call.1} parent=1 // pred_fallthru
      _
    // Predicated region
    $region14: #{tpu_custom_call.1} parent=1 // pred_check
      _
    $region15: #{tpu_custom_call.1} parent=1 // pred_check_branch
      %21 = sbr.rel (0) target = $region17
    $region16: #{tpu_custom_call.1} parent=1 // pred_region
      _
    $region17: #{tpu_custom_call.1} parent=1 // pred_fallthru
      _
    // Predicated region
    $region18: #{tpu_custom_call.1} parent=1 // pred_check
      _
    $region19: #{tpu_custom_call.1} parent=1 // pred_check_branch
      %23 = sbr.rel (0) target = $region21
    $region20: #{tpu_custom_call.1} parent=1 // pred_region
      _
    $region21: #{tpu_custom_call.1} parent=1 // pred_fallthru
      _
    // Predicated region
    $region22: #{tpu_custom_call.1} parent=1 // pred_check
      _
    $region23: #{tpu_custom_call.1} parent=1 // pred_check_branch
      %25 = sbr.rel (0) target = $region25
    $region24: #{tpu_custom_call.1} parent=1 // pred_region
      _
    $region25: #{tpu_custom_call.1} parent=1 // pred_fallthru
      _
    // Predicated region
    $region26: #{tpu_custom_call.1} parent=1 // pred_check
      _
    $region27: #{tpu_custom_call.1} parent=1 // pred_check_branch
      %27 = sbr.rel (0) target = $region29
    $region28: #{tpu_custom_call.1} parent=1 // pred_region
      _
    $region29: #{tpu_custom_call.1} parent=1 // pred_fallthru
      _
    // Predicated region
    $region30: #{tpu_custom_call.1} parent=1 // pred_check
      _
    $region31: #{tpu_custom_call.1} parent=1 // pred_check_branch
      %29 = sbr.rel (0) target = $region33
    $region32: #{tpu_custom_call.1} parent=1 // pred_region
      _
    $region33: #{tpu_custom_call.1} parent=1 // pred_fallthru
      _
    %v30 = vld [vmem:[%s0] sm:$0xff]
    %v31 = vld [vmem:[%s0 + $0x8] sm:$0xff]
    %v32 = vld [vmem:[%s0 + $0x10] sm:$0xff]
    %v33 = vld [vmem:[%s0 + $0x18] sm:$0xff]
    %v34 = vld [vmem:[%s0 + $0x20] sm:$0xff]
    %v35 = vld [vmem:[%s0 + $0x28] sm:$0xff]
    %v36 = vld [vmem:[%s0 + $0x30] sm:$0xff]
    %v37 = vld [vmem:[%s0 + $0x38] sm:$0xff]
    %v38 = vld [vmem:[%s0 + $0x40] sm:$0xff]
    %v39 = vld [vmem:[%s0 + $0x48] sm:$0xff]
    %v40 = vld [vmem:[%s0 + $0x50] sm:$0xff]
    %v41 = vld [vmem:[%s0 + $0x58] sm:$0xff]
    %v42 = vld [vmem:[%s0 + $0x60] sm:$0xff]
    %v43 = vld [vmem:[%s0 + $0x68] sm:$0xff]
    %v44 = vld [vmem:[%s0 + $0x70] sm:$0xff]
    %v45 = vld [vmem:[%s0 + $0x78] sm:$0xff]
    %v46 = vld [vmem:[%s0 + $0x80] sm:$0xff]
    %v47 = vld [vmem:[%s0 + $0x88] sm:$0xff]
    %v48 = vld [vmem:[%s0 + $0x90] sm:$0xff]
    %v49 = vld [vmem:[%s0 + $0x98] sm:$0xff]
    %v50 = vld [vmem:[%s0 + $0xa0] sm:$0xff]
    %v51 = vld [vmem:[%s0 + $0xa8] sm:$0xff]
    %v52 = vld [vmem:[%s0 + $0xb0] sm:$0xff]
    %v53 = vld [vmem:[%s0 + $0xb8] sm:$0xff]
    %v54 = vld [vmem:[%s0 + $0xc0] sm:$0xff]
    %v55 = vld [vmem:[%s0 + $0xc8] sm:$0xff]
    %v56 = vld [vmem:[%s0 + $0xd0] sm:$0xff]
    %v57 = vld [vmem:[%s0 + $0xd8] sm:$0xff]
    %v58 = vld [vmem:[%s0 + $0xe0] sm:$0xff]
    %v59 = vld [vmem:[%s0 + $0xe8] sm:$0xff]
    %v60 = vld [vmem:[%s0 + $0xf0] sm:$0xff]
    %v61 = vld [vmem:[%s0 + $0xf8] sm:$0xff]
    %v62 = vld [vmem:[%s0 + $0x100] sm:$0xff]
    %v63 = vld [vmem:[%s0 + $0x108] sm:$0xff]
    %v64 = vld [vmem:[%s0 + $0x110] sm:$0xff]
    %v65 = vld [vmem:[%s0 + $0x118] sm:$0xff]
    %v66 = vld [vmem:[%s0 + $0x120] sm:$0xff]
    %v67 = vld [vmem:[%s0 + $0x128] sm:$0xff]
    %v68 = vld [vmem:[%s1] sm:$0xff]
    %v69 = vld [vmem:[%s1 + $0x8] sm:$0xff]
    %v70 = vld [vmem:[%s1 + $0x10] sm:$0xff]
    %v71 = vld [vmem:[%s1 + $0x18] sm:$0xff]
    %v72 = vld [vmem:[%s1 + $0x20] sm:$0xff]
    %v73 = vld [vmem:[%s1 + $0x28] sm:$0xff]
    %v74 = vld [vmem:[%s1 + $0x30] sm:$0xff]
    %v75 = vld [vmem:[%s1 + $0x38] sm:$0xff]
    %v76 = vld [vmem:[%s1 + $0x40] sm:$0xff]
    %v77 = vld [vmem:[%s1 + $0x48] sm:$0xff]
    %v78 = vld [vmem:[%s1 + $0x50] sm:$0xff]
    %v79 = vld [vmem:[%s1 + $0x58] sm:$0xff]
    %v80 = vld [vmem:[%s1 + $0x60] sm:$0xff]
    %v81 = vld [vmem:[%s1 + $0x68] sm:$0xff]
    %v82 = vld [vmem:[%s1 + $0x70] sm:$0xff]
    %v83 = vld [vmem:[%s1 + $0x78] sm:$0xff]
    %v84 = vld [vmem:[%s1 + $0x80] sm:$0xff]
    %v85 = vld [vmem:[%s1 + $0x88] sm:$0xff]
    %v86 = vld [vmem:[%s1 + $0x90] sm:$0xff]
    %v87 = vld [vmem:[%s1 + $0x98] sm:$0xff]
    %v88 = vld [vmem:[%s1 + $0xa0] sm:$0xff]
    %v89 = vld [vmem:[%s1 + $0xa8] sm:$0xff]
    %v90 = vld [vmem:[%s1 + $0xb0] sm:$0xff]
    %v91 = vld [vmem:[%s1 + $0xb8] sm:$0xff]
    %v92 = vld [vmem:[%s1 + $0xc0] sm:$0xff]
    %v93 = vld [vmem:[%s1 + $0xc8] sm:$0xff]
    %v94 = vld [vmem:[%s1 + $0xd0] sm:$0xff]
    %v95 = vld [vmem:[%s1 + $0xd8] sm:$0xff]
    %v96 = vld [vmem:[%s1 + $0xe0] sm:$0xff]
    %v97 = vld [vmem:[%s1 + $0xe8] sm:$0xff]
    %v98 = vld [vmem:[%s1 + $0xf0] sm:$0xff]
    %v99 = vld [vmem:[%s1 + $0xf8] sm:$0xff]
    %v100 = vld [vmem:[%s1 + $0x100] sm:$0xff]
    %v101 = vld [vmem:[%s1 + $0x108] sm:$0xff]
    %v102 = vld [vmem:[%s1 + $0x110] sm:$0xff]
    %v103 = vld [vmem:[%s1 + $0x118] sm:$0xff]
    %v104 = vld [vmem:[%s1 + $0x120] sm:$0xff]
    %v105 = vld [vmem:[%s1 + $0x128] sm:$0xff]
    %v106 = vxor.u32 %v68, 2147483648
    %v107 = vxor.u32 %v69, 2147483648
    %v108 = vxor.u32 %v70, 2147483648
    %v109 = vxor.u32 %v71, 2147483648
    %v110 = vxor.u32 %v72, 2147483648
    %v111 = vxor.u32 %v73, 2147483648
    %v112 = vxor.u32 %v74, 2147483648
    %v113 = vxor.u32 %v75, 2147483648
    %v114 = vxor.u32 %v76, 2147483648
    %v115 = vxor.u32 %v77, 2147483648
    %v116 = vxor.u32 %v78, 2147483648
    %v117 = vxor.u32 %v79, 2147483648
    %v118 = vxor.u32 %v80, 2147483648
    %v119 = vxor.u32 %v81, 2147483648
    %v120 = vxor.u32 %v82, 2147483648
    %v121 = vxor.u32 %v83, 2147483648
    %v122 = vxor.u32 %v84, 2147483648
    %v123 = vxor.u32 %v85, 2147483648
    %v124 = vxor.u32 %v86, 2147483648
    %v125 = vxor.u32 %v87, 2147483648
    %v126 = vxor.u32 %v88, 2147483648
    %v127 = vxor.u32 %v89, 2147483648
    %v128 = vxor.u32 %v90, 2147483648
    %v129 = vxor.u32 %v91, 2147483648
    %v130 = vxor.u32 %v92, 2147483648
    %v131 = vxor.u32 %v93, 2147483648
    %v132 = vxor.u32 %v94, 2147483648
    %v133 = vxor.u32 %v95, 2147483648
    %v134 = vxor.u32 %v96, 2147483648
    %v135 = vxor.u32 %v97, 2147483648
    %v136 = vxor.u32 %v98, 2147483648
    %v137 = vxor.u32 %v99, 2147483648
    %v138 = vxor.u32 %v100, 2147483648
    %v139 = vxor.u32 %v101, 2147483648
    %v140 = vxor.u32 %v102, 2147483648
    %v141 = vxor.u32 %v103, 2147483648
    %v142 = vxor.u32 %v104, 2147483648
    %v143 = vxor.u32 %v105, 2147483648
    %v144 = vmul.f32 %v106, 1.442695
    %v145 = vpow.pop %v144
    %v146 = vmul.f32 %v107, 1.442695
    %v147 = vpow.pop %v146
    %v148 = vmul.f32 %v108, 1.442695
    %v149 = vpow.pop %v148
    %v150 = vmul.f32 %v109, 1.442695
    %v151 = vpow.pop %v150
    %v152 = vmul.f32 %v110, 1.442695
    %v153 = vpow.pop %v152
    %v154 = vmul.f32 %v111, 1.442695
    %v155 = vpow.pop %v154
    %v156 = vmul.f32 %v112, 1.442695
    %v157 = vpow.pop %v156
    %v158 = vmul.f32 %v113, 1.442695
    %v159 = vpow.pop %v158
    %v160 = vmul.f32 %v114, 1.442695
    %v161 = vpow.pop %v160
    %v162 = vmul.f32 %v115, 1.442695
    %v163 = vpow.pop %v162
    %v164 = vmul.f32 %v116, 1.442695
    %v165 = vpow.pop %v164
    %v166 = vmul.f32 %v117, 1.442695
    %v167 = vpow.pop %v166
    %v168 = vmul.f32 %v118, 1.442695
    %v169 = vpow.pop %v168
    %v170 = vmul.f32 %v119, 1.442695
    %v171 = vpow.pop %v170
    %v172 = vmul.f32 %v120, 1.442695
    %v173 = vpow.pop %v172
    %v174 = vmul.f32 %v121, 1.442695
    %v175 = vpow.pop %v174
    %v176 = vmul.f32 %v122, 1.442695
    %v177 = vpow.pop %v176
    %v178 = vmul.f32 %v123, 1.442695
    %v179 = vpow.pop %v178
    %v180 = vmul.f32 %v124, 1.442695
    %v181 = vpow.pop %v180
    %v182 = vmul.f32 %v125, 1.442695
    %v183 = vpow.pop %v182
    %v184 = vmul.f32 %v126, 1.442695
    %v185 = vpow.pop %v184
    %v186 = vmul.f32 %v127, 1.442695
    %v187 = vpow.pop %v186
    %v188 = vmul.f32 %v128, 1.442695
    %v189 = vpow.pop %v188
    %v190 = vmul.f32 %v129, 1.442695
    %v191 = vpow.pop %v190
    %v192 = vmul.f32 %v130, 1.442695
    %v193 = vpow.pop %v192
    %v194 = vmul.f32 %v131, 1.442695
    %v195 = vpow.pop %v194
    %v196 = vmul.f32 %v132, 1.442695
    %v197 = vpow.pop %v196
    %v198 = vmul.f32 %v133, 1.442695
    %v199 = vpow.pop %v198
    %v200 = vmul.f32 %v134, 1.442695
    %v201 = vpow.pop %v200
    %v202 = vmul.f32 %v135, 1.442695
    %v203 = vpow.pop %v202
    %v204 = vmul.f32 %v136, 1.442695
    %v205 = vpow.pop %v204
    %v206 = vmul.f32 %v137, 1.442695
    %v207 = vpow.pop %v206
    %v208 = vmul.f32 %v138, 1.442695
    %v209 = vpow.pop %v208
    %v210 = vmul.f32 %v139, 1.442695
    %v211 = vpow.pop %v210
    %v212 = vmul.f32 %v140, 1.442695
    %v213 = vpow.pop %v212
    %v214 = vmul.f32 %v141, 1.442695
    %v215 = vpow.pop %v214
    %v216 = vmul.f32 %v142, 1.442695
    %v217 = vpow.pop %v216
    %v218 = vmul.f32 %v143, 1.442695
    %v219 = vpow.pop %v218
    %v220 = vadd.f32 %v145, 1.0
    %v221 = vadd.f32 %v147, 1.0
    %v222 = vadd.f32 %v149, 1.0
    %v223 = vadd.f32 %v151, 1.0
    %v224 = vadd.f32 %v153, 1.0
    %v225 = vadd.f32 %v155, 1.0
    %v226 = vadd.f32 %v157, 1.0
    %v227 = vadd.f32 %v159, 1.0
    %v228 = vadd.f32 %v161, 1.0
    %v229 = vadd.f32 %v163, 1.0
    %v230 = vadd.f32 %v165, 1.0
    %v231 = vadd.f32 %v167, 1.0
    %v232 = vadd.f32 %v169, 1.0
    %v233 = vadd.f32 %v171, 1.0
    %v234 = vadd.f32 %v173, 1.0
    %v235 = vadd.f32 %v175, 1.0
    %v236 = vadd.f32 %v177, 1.0
    %v237 = vadd.f32 %v179, 1.0
    %v238 = vadd.f32 %v181, 1.0
    %v239 = vadd.f32 %v183, 1.0
    %v240 = vadd.f32 %v185, 1.0
    %v241 = vadd.f32 %v187, 1.0
    %v242 = vadd.f32 %v189, 1.0
    %v243 = vadd.f32 %v191, 1.0
    %v244 = vadd.f32 %v193, 1.0
    %v245 = vadd.f32 %v195, 1.0
    %v246 = vadd.f32 %v197, 1.0
    %v247 = vadd.f32 %v199, 1.0
    %v248 = vadd.f32 %v201, 1.0
    %v249 = vadd.f32 %v203, 1.0
    %v250 = vadd.f32 %v205, 1.0
    %v251 = vadd.f32 %v207, 1.0
    %v252 = vadd.f32 %v209, 1.0
    %v253 = vadd.f32 %v211, 1.0
    %v254 = vadd.f32 %v213, 1.0
    %v255 = vadd.f32 %v215, 1.0
    %v256 = vadd.f32 %v217, 1.0
    %v257 = vadd.f32 %v219, 1.0
    %v258 = vrcp.pop %v220
    %v259 = vmul.f32 %v220, %v258
    %v260 = vsub.f32 1.0, %v259
    %v261 = vmul.f32 %v258, %v260
    %v262 = vadd.f32 %v258, %v261
    %vm263 = vweird.f32 %v220
    %vm264 = vweird.f32 %v258
    %vm265 = vmor %vm263, %vm264
    %v266 = vsel %vm265, %v258, %v262
    %v267 = vand.u32 2147483647, %v220
    %vm268 = vcmp.eq.f32.partialorder %v267, 8.507059e+37
    %v269 = vand.u32 %v220, 2147483648
    %v270 = vor.u32 1.1754944e-38, %v269
    %v271 = vsel %vm268, %v270, %v266
    %v272 = vmul.f32 1.0, %v271
    %v273 = vrcp.pop %v221
    %v274 = vmul.f32 %v221, %v273
    %v275 = vsub.f32 1.0, %v274
    %v276 = vmul.f32 %v273, %v275
    %v277 = vadd.f32 %v273, %v276
    %vm278 = vweird.f32 %v221
    %vm279 = vweird.f32 %v273
    %vm280 = vmor %vm278, %vm279
    %v281 = vsel %vm280, %v273, %v277
    %v282 = vand.u32 2147483647, %v221
    %vm283 = vcmp.eq.f32.partialorder %v282, 8.507059e+37
    %v284 = vand.u32 %v221, 2147483648
    %v285 = vor.u32 1.1754944e-38, %v284
    %v286 = vsel %vm283, %v285, %v281
    %v287 = vmul.f32 1.0, %v286
    %v288 = vrcp.pop %v222
    %v289 = vmul.f32 %v222, %v288
    %v290 = vsub.f32 1.0, %v289
    %v291 = vmul.f32 %v288, %v290
    %v292 = vadd.f32 %v288, %v291
    %vm293 = vweird.f32 %v222
    %vm294 = vweird.f32 %v288
    %vm295 = vmor %vm293, %vm294
    %v296 = vsel %vm295, %v288, %v292
    %v297 = vand.u32 2147483647, %v222
    %vm298 = vcmp.eq.f32.partialorder %v297, 8.507059e+37
    %v299 = vand.u32 %v222, 2147483648
    %v300 = vor.u32 1.1754944e-38, %v299
    %v301 = vsel %vm298, %v300, %v296
    %v302 = vmul.f32 1.0, %v301
    %v303 = vrcp.pop %v223
    %v304 = vmul.f32 %v223, %v303
    %v305 = vsub.f32 1.0, %v304
    %v306 = vmul.f32 %v303, %v305
    %v307 = vadd.f32 %v303, %v306
    %vm308 = vweird.f32 %v223
    %vm309 = vweird.f32 %v303
    %vm310 = vmor %vm308, %vm309
    %v311 = vsel %vm310, %v303, %v307
    %v312 = vand.u32 2147483647, %v223
    %vm313 = vcmp.eq.f32.partialorder %v312, 8.507059e+37
    %v314 = vand.u32 %v223, 2147483648
    %v315 = vor.u32 1.1754944e-38, %v314
    %v316 = vsel %vm313, %v315, %v311
    %v317 = vmul.f32 1.0, %v316
    %v318 = vrcp.pop %v224
    %v319 = vmul.f32 %v224, %v318
    %v320 = vsub.f32 1.0, %v319
    %v321 = vmul.f32 %v318, %v320
    %v322 = vadd.f32 %v318, %v321
    %vm323 = vweird.f32 %v224
    %vm324 = vweird.f32 %v318
    %vm325 = vmor %vm323, %vm324
    %v326 = vsel %vm325, %v318, %v322
    %v327 = vand.u32 2147483647, %v224
    %vm328 = vcmp.eq.f32.partialorder %v327, 8.507059e+37
    %v329 = vand.u32 %v224, 2147483648
    %v330 = vor.u32 1.1754944e-38, %v329
    %v331 = vsel %vm328, %v330, %v326
    %v332 = vmul.f32 1.0, %v331
    %v333 = vrcp.pop %v225
    %v334 = vmul.f32 %v225, %v333
    %v335 = vsub.f32 1.0, %v334
    %v336 = vmul.f32 %v333, %v335
    %v337 = vadd.f32 %v333, %v336
    %vm338 = vweird.f32 %v225
    %vm339 = vweird.f32 %v333
    %vm340 = vmor %vm338, %vm339
    %v341 = vsel %vm340, %v333, %v337
    %v342 = vand.u32 2147483647, %v225
    %vm343 = vcmp.eq.f32.partialorder %v342, 8.507059e+37
    %v344 = vand.u32 %v225, 2147483648
    %v345 = vor.u32 1.1754944e-38, %v344
    %v346 = vsel %vm343, %v345, %v341
    %v347 = vmul.f32 1.0, %v346
    %v348 = vrcp.pop %v226
    %v349 = vmul.f32 %v226, %v348
    %v350 = vsub.f32 1.0, %v349
    %v351 = vmul.f32 %v348, %v350
    %v352 = vadd.f32 %v348, %v351
    %vm353 = vweird.f32 %v226
    %vm354 = vweird.f32 %v348
    %vm355 = vmor %vm353, %vm354
    %v356 = vsel %vm355, %v348, %v352
    %v357 = vand.u32 2147483647, %v226
    %vm358 = vcmp.eq.f32.partialorder %v357, 8.507059e+37
    %v359 = vand.u32 %v226, 2147483648
    %v360 = vor.u32 1.1754944e-38, %v359
    %v361 = vsel %vm358, %v360, %v356
    %v362 = vmul.f32 1.0, %v361
    %v363 = vrcp.pop %v227
    %v364 = vmul.f32 %v227, %v363
    %v365 = vsub.f32 1.0, %v364
    %v366 = vmul.f32 %v363, %v365
    %v367 = vadd.f32 %v363, %v366
    %vm368 = vweird.f32 %v227
    %vm369 = vweird.f32 %v363
    %vm370 = vmor %vm368, %vm369
    %v371 = vsel %vm370, %v363, %v367
    %v372 = vand.u32 2147483647, %v227
    %vm373 = vcmp.eq.f32.partialorder %v372, 8.507059e+37
    %v374 = vand.u32 %v227, 2147483648
    %v375 = vor.u32 1.1754944e-38, %v374
    %v376 = vsel %vm373, %v375, %v371
    %v377 = vmul.f32 1.0, %v376
    %v378 = vrcp.pop %v228
    %v379 = vmul.f32 %v228, %v378
    %v380 = vsub.f32 1.0, %v379
    %v381 = vmul.f32 %v378, %v380
    %v382 = vadd.f32 %v378, %v381
    %vm383 = vweird.f32 %v228
    %vm384 = vweird.f32 %v378
    %vm385 = vmor %vm383, %vm384
    %v386 = vsel %vm385, %v378, %v382
    %v387 = vand.u32 2147483647, %v228
    %vm388 = vcmp.eq.f32.partialorder %v387, 8.507059e+37
    %v389 = vand.u32 %v228, 2147483648
    %v390 = vor.u32 1.1754944e-38, %v389
    %v391 = vsel %vm388, %v390, %v386
    %v392 = vmul.f32 1.0, %v391
    %v393 = vrcp.pop %v229
    %v394 = vmul.f32 %v229, %v393
    %v395 = vsub.f32 1.0, %v394
    %v396 = vmul.f32 %v393, %v395
    %v397 = vadd.f32 %v393, %v396
    %vm398 = vweird.f32 %v229
    %vm399 = vweird.f32 %v393
    %vm400 = vmor %vm398, %vm399
    %v401 = vsel %vm400, %v393, %v397
    %v402 = vand.u32 2147483647, %v229
    %vm403 = vcmp.eq.f32.partialorder %v402, 8.507059e+37
    %v404 = vand.u32 %v229, 2147483648
    %v405 = vor.u32 1.1754944e-38, %v404
    %v406 = vsel %vm403, %v405, %v401
    %v407 = vmul.f32 1.0, %v406
    %v408 = vrcp.pop %v230
    %v409 = vmul.f32 %v230, %v408
    %v410 = vsub.f32 1.0, %v409
    %v411 = vmul.f32 %v408, %v410
    %v412 = vadd.f32 %v408, %v411
    %vm413 = vweird.f32 %v230
    %vm414 = vweird.f32 %v408
    %vm415 = vmor %vm413, %vm414
    %v416 = vsel %vm415, %v408, %v412
    %v417 = vand.u32 2147483647, %v230
    %vm418 = vcmp.eq.f32.partialorder %v417, 8.507059e+37
    %v419 = vand.u32 %v230, 2147483648
    %v420 = vor.u32 1.1754944e-38, %v419
    %v421 = vsel %vm418, %v420, %v416
    %v422 = vmul.f32 1.0, %v421
    %v423 = vrcp.pop %v231
    %v424 = vmul.f32 %v231, %v423
    %v425 = vsub.f32 1.0, %v424
    %v426 = vmul.f32 %v423, %v425
    %v427 = vadd.f32 %v423, %v426
    %vm428 = vweird.f32 %v231
    %vm429 = vweird.f32 %v423
    %vm430 = vmor %vm428, %vm429
    %v431 = vsel %vm430, %v423, %v427
    %v432 = vand.u32 2147483647, %v231
    %vm433 = vcmp.eq.f32.partialorder %v432, 8.507059e+37
    %v434 = vand.u32 %v231, 2147483648
    %v435 = vor.u32 1.1754944e-38, %v434
    %v436 = vsel %vm433, %v435, %v431
    %v437 = vmul.f32 1.0, %v436
    %v438 = vrcp.pop %v232
    %v439 = vmul.f32 %v232, %v438
    %v440 = vsub.f32 1.0, %v439
    %v441 = vmul.f32 %v438, %v440
    %v442 = vadd.f32 %v438, %v441
    %vm443 = vweird.f32 %v232
    %vm444 = vweird.f32 %v438
    %vm445 = vmor %vm443, %vm444
    %v446 = vsel %vm445, %v438, %v442
    %v447 = vand.u32 2147483647, %v232
    %vm448 = vcmp.eq.f32.partialorder %v447, 8.507059e+37
    %v449 = vand.u32 %v232, 2147483648
    %v450 = vor.u32 1.1754944e-38, %v449
    %v451 = vsel %vm448, %v450, %v446
    %v452 = vmul.f32 1.0, %v451
    %v453 = vrcp.pop %v233
    %v454 = vmul.f32 %v233, %v453
    %v455 = vsub.f32 1.0, %v454
    %v456 = vmul.f32 %v453, %v455
    %v457 = vadd.f32 %v453, %v456
    %vm458 = vweird.f32 %v233
    %vm459 = vweird.f32 %v453
    %vm460 = vmor %vm458, %vm459
    %v461 = vsel %vm460, %v453, %v457
    %v462 = vand.u32 2147483647, %v233
    %vm463 = vcmp.eq.f32.partialorder %v462, 8.507059e+37
    %v464 = vand.u32 %v233, 2147483648
    %v465 = vor.u32 1.1754944e-38, %v464
    %v466 = vsel %vm463, %v465, %v461
    %v467 = vmul.f32 1.0, %v466
    %v468 = vrcp.pop %v234
    %v469 = vmul.f32 %v234, %v468
    %v470 = vsub.f32 1.0, %v469
    %v471 = vmul.f32 %v468, %v470
    %v472 = vadd.f32 %v468, %v471
    %vm473 = vweird.f32 %v234
    %vm474 = vweird.f32 %v468
    %vm475 = vmor %vm473, %vm474
    %v476 = vsel %vm475, %v468, %v472
    %v477 = vand.u32 2147483647, %v234
    %vm478 = vcmp.eq.f32.partialorder %v477, 8.507059e+37
    %v479 = vand.u32 %v234, 2147483648
    %v480 = vor.u32 1.1754944e-38, %v479
    %v481 = vsel %vm478, %v480, %v476
    %v482 = vmul.f32 1.0, %v481
    %v483 = vrcp.pop %v235
    %v484 = vmul.f32 %v235, %v483
    %v485 = vsub.f32 1.0, %v484
    %v486 = vmul.f32 %v483, %v485
    %v487 = vadd.f32 %v483, %v486
    %vm488 = vweird.f32 %v235
    %vm489 = vweird.f32 %v483
    %vm490 = vmor %vm488, %vm489
    %v491 = vsel %vm490, %v483, %v487
    %v492 = vand.u32 2147483647, %v235
    %vm493 = vcmp.eq.f32.partialorder %v492, 8.507059e+37
    %v494 = vand.u32 %v235, 2147483648
    %v495 = vor.u32 1.1754944e-38, %v494
    %v496 = vsel %vm493, %v495, %v491
    %v497 = vmul.f32 1.0, %v496
    %v498 = vrcp.pop %v236
    %v499 = vmul.f32 %v236, %v498
    %v500 = vsub.f32 1.0, %v499
    %v501 = vmul.f32 %v498, %v500
    %v502 = vadd.f32 %v498, %v501
    %vm503 = vweird.f32 %v236
    %vm504 = vweird.f32 %v498
    %vm505 = vmor %vm503, %vm504
    %v506 = vsel %vm505, %v498, %v502
    %v507 = vand.u32 2147483647, %v236
    %vm508 = vcmp.eq.f32.partialorder %v507, 8.507059e+37
    %v509 = vand.u32 %v236, 2147483648
    %v510 = vor.u32 1.1754944e-38, %v509
    %v511 = vsel %vm508, %v510, %v506
    %v512 = vmul.f32 1.0, %v511
    %v513 = vrcp.pop %v237
    %v514 = vmul.f32 %v237, %v513
    %v515 = vsub.f32 1.0, %v514
    %v516 = vmul.f32 %v513, %v515
    %v517 = vadd.f32 %v513, %v516
    %vm518 = vweird.f32 %v237
    %vm519 = vweird.f32 %v513
    %vm520 = vmor %vm518, %vm519
    %v521 = vsel %vm520, %v513, %v517
    %v522 = vand.u32 2147483647, %v237
    %vm523 = vcmp.eq.f32.partialorder %v522, 8.507059e+37
    %v524 = vand.u32 %v237, 2147483648
    %v525 = vor.u32 1.1754944e-38, %v524
    %v526 = vsel %vm523, %v525, %v521
    %v527 = vmul.f32 1.0, %v526
    %v528 = vrcp.pop %v238
    %v529 = vmul.f32 %v238, %v528
    %v530 = vsub.f32 1.0, %v529
    %v531 = vmul.f32 %v528, %v530
    %v532 = vadd.f32 %v528, %v531
    %vm533 = vweird.f32 %v238
    %vm534 = vweird.f32 %v528
    %vm535 = vmor %vm533, %vm534
    %v536 = vsel %vm535, %v528, %v532
    %v537 = vand.u32 2147483647, %v238
    %vm538 = vcmp.eq.f32.partialorder %v537, 8.507059e+37
    %v539 = vand.u32 %v238, 2147483648
    %v540 = vor.u32 1.1754944e-38, %v539
    %v541 = vsel %vm538, %v540, %v536
    %v542 = vmul.f32 1.0, %v541
    %v543 = vrcp.pop %v239
    %v544 = vmul.f32 %v239, %v543
    %v545 = vsub.f32 1.0, %v544
    %v546 = vmul.f32 %v543, %v545
    %v547 = vadd.f32 %v543, %v546
    %vm548 = vweird.f32 %v239
    %vm549 = vweird.f32 %v543
    %vm550 = vmor %vm548, %vm549
    %v551 = vsel %vm550, %v543, %v547
    %v552 = vand.u32 2147483647, %v239
    %vm553 = vcmp.eq.f32.partialorder %v552, 8.507059e+37
    %v554 = vand.u32 %v239, 2147483648
    %v555 = vor.u32 1.1754944e-38, %v554
    %v556 = vsel %vm553, %v555, %v551
    %v557 = vmul.f32 1.0, %v556
    %v558 = vrcp.pop %v240
    %v559 = vmul.f32 %v240, %v558
    %v560 = vsub.f32 1.0, %v559
    %v561 = vmul.f32 %v558, %v560
    %v562 = vadd.f32 %v558, %v561
    %vm563 = vweird.f32 %v240
    %vm564 = vweird.f32 %v558
    %vm565 = vmor %vm563, %vm564
    %v566 = vsel %vm565, %v558, %v562
    %v567 = vand.u32 2147483647, %v240
    %vm568 = vcmp.eq.f32.partialorder %v567, 8.507059e+37
    %v569 = vand.u32 %v240, 2147483648
    %v570 = vor.u32 1.1754944e-38, %v569
    %v571 = vsel %vm568, %v570, %v566
    %v572 = vmul.f32 1.0, %v571
    %v573 = vrcp.pop %v241
    %v574 = vmul.f32 %v241, %v573
    %v575 = vsub.f32 1.0, %v574
    %v576 = vmul.f32 %v573, %v575
    %v577 = vadd.f32 %v573, %v576
    %vm578 = vweird.f32 %v241
    %vm579 = vweird.f32 %v573
    %vm580 = vmor %vm578, %vm579
    %v581 = vsel %vm580, %v573, %v577
    %v582 = vand.u32 2147483647, %v241
    %vm583 = vcmp.eq.f32.partialorder %v582, 8.507059e+37
    %v584 = vand.u32 %v241, 2147483648
    %v585 = vor.u32 1.1754944e-38, %v584
    %v586 = vsel %vm583, %v585, %v581
    %v587 = vmul.f32 1.0, %v586
    %v588 = vrcp.pop %v242
    %v589 = vmul.f32 %v242, %v588
    %v590 = vsub.f32 1.0, %v589
    %v591 = vmul.f32 %v588, %v590
    %v592 = vadd.f32 %v588, %v591
    %vm593 = vweird.f32 %v242
    %vm594 = vweird.f32 %v588
    %vm595 = vmor %vm593, %vm594
    %v596 = vsel %vm595, %v588, %v592
    %v597 = vand.u32 2147483647, %v242
    %vm598 = vcmp.eq.f32.partialorder %v597, 8.507059e+37
    %v599 = vand.u32 %v242, 2147483648
    %v600 = vor.u32 1.1754944e-38, %v599
    %v601 = vsel %vm598, %v600, %v596
    %v602 = vmul.f32 1.0, %v601
    %v603 = vrcp.pop %v243
    %v604 = vmul.f32 %v243, %v603
    %v605 = vsub.f32 1.0, %v604
    %v606 = vmul.f32 %v603, %v605
    %v607 = vadd.f32 %v603, %v606
    %vm608 = vweird.f32 %v243
    %vm609 = vweird.f32 %v603
    %vm610 = vmor %vm608, %vm609
    %v611 = vsel %vm610, %v603, %v607
    %v612 = vand.u32 2147483647, %v243
    %vm613 = vcmp.eq.f32.partialorder %v612, 8.507059e+37
    %v614 = vand.u32 %v243, 2147483648
    %v615 = vor.u32 1.1754944e-38, %v614
    %v616 = vsel %vm613, %v615, %v611
    %v617 = vmul.f32 1.0, %v616
    %v618 = vrcp.pop %v244
    %v619 = vmul.f32 %v244, %v618
    %v620 = vsub.f32 1.0, %v619
    %v621 = vmul.f32 %v618, %v620
    %v622 = vadd.f32 %v618, %v621
    %vm623 = vweird.f32 %v244
    %vm624 = vweird.f32 %v618
    %vm625 = vmor %vm623, %vm624
    %v626 = vsel %vm625, %v618, %v622
    %v627 = vand.u32 2147483647, %v244
    %vm628 = vcmp.eq.f32.partialorder %v627, 8.507059e+37
    %v629 = vand.u32 %v244, 2147483648
    %v630 = vor.u32 1.1754944e-38, %v629
    %v631 = vsel %vm628, %v630, %v626
    %v632 = vmul.f32 1.0, %v631
    %v633 = vrcp.pop %v245
    %v634 = vmul.f32 %v245, %v633
    %v635 = vsub.f32 1.0, %v634
    %v636 = vmul.f32 %v633, %v635
    %v637 = vadd.f32 %v633, %v636
    %vm638 = vweird.f32 %v245
    %vm639 = vweird.f32 %v633
    %vm640 = vmor %vm638, %vm639
    %v641 = vsel %vm640, %v633, %v637
    %v642 = vand.u32 2147483647, %v245
    %vm643 = vcmp.eq.f32.partialorder %v642, 8.507059e+37
    %v644 = vand.u32 %v245, 2147483648
    %v645 = vor.u32 1.1754944e-38, %v644
    %v646 = vsel %vm643, %v645, %v641
    %v647 = vmul.f32 1.0, %v646
    %v648 = vrcp.pop %v246
    %v649 = vmul.f32 %v246, %v648
    %v650 = vsub.f32 1.0, %v649
    %v651 = vmul.f32 %v648, %v650
    %v652 = vadd.f32 %v648, %v651
    %vm653 = vweird.f32 %v246
    %vm654 = vweird.f32 %v648
    %vm655 = vmor %vm653, %vm654
    %v656 = vsel %vm655, %v648, %v652
    %v657 = vand.u32 2147483647, %v246
    %vm658 = vcmp.eq.f32.partialorder %v657, 8.507059e+37
    %v659 = vand.u32 %v246, 2147483648
    %v660 = vor.u32 1.1754944e-38, %v659
    %v661 = vsel %vm658, %v660, %v656
    %v662 = vmul.f32 1.0, %v661
    %v663 = vrcp.pop %v247
    %v664 = vmul.f32 %v247, %v663
    %v665 = vsub.f32 1.0, %v664
    %v666 = vmul.f32 %v663, %v665
    %v667 = vadd.f32 %v663, %v666
    %vm668 = vweird.f32 %v247
    %vm669 = vweird.f32 %v663
    %vm670 = vmor %vm668, %vm669
    %v671 = vsel %vm670, %v663, %v667
    %v672 = vand.u32 2147483647, %v247
    %vm673 = vcmp.eq.f32.partialorder %v672, 8.507059e+37
    %v674 = vand.u32 %v247, 2147483648
    %v675 = vor.u32 1.1754944e-38, %v674
    %v676 = vsel %vm673, %v675, %v671
    %v677 = vmul.f32 1.0, %v676
    %v678 = vrcp.pop %v248
    %v679 = vmul.f32 %v248, %v678
    %v680 = vsub.f32 1.0, %v679
    %v681 = vmul.f32 %v678, %v680
    %v682 = vadd.f32 %v678, %v681
    %vm683 = vweird.f32 %v248
    %vm684 = vweird.f32 %v678
    %vm685 = vmor %vm683, %vm684
    %v686 = vsel %vm685, %v678, %v682
    %v687 = vand.u32 2147483647, %v248
    %vm688 = vcmp.eq.f32.partialorder %v687, 8.507059e+37
    %v689 = vand.u32 %v248, 2147483648
    %v690 = vor.u32 1.1754944e-38, %v689
    %v691 = vsel %vm688, %v690, %v686
    %v692 = vmul.f32 1.0, %v691
    %v693 = vrcp.pop %v249
    %v694 = vmul.f32 %v249, %v693
    %v695 = vsub.f32 1.0, %v694
    %v696 = vmul.f32 %v693, %v695
    %v697 = vadd.f32 %v693, %v696
    %vm698 = vweird.f32 %v249
    %vm699 = vweird.f32 %v693
    %vm700 = vmor %vm698, %vm699
    %v701 = vsel %vm700, %v693, %v697
    %v702 = vand.u32 2147483647, %v249
    %vm703 = vcmp.eq.f32.partialorder %v702, 8.507059e+37
    %v704 = vand.u32 %v249, 2147483648
    %v705 = vor.u32 1.1754944e-38, %v704
    %v706 = vsel %vm703, %v705, %v701
    %v707 = vmul.f32 1.0, %v706
    %v708 = vrcp.pop %v250
    %v709 = vmul.f32 %v250, %v708
    %v710 = vsub.f32 1.0, %v709
    %v711 = vmul.f32 %v708, %v710
    %v712 = vadd.f32 %v708, %v711
    %vm713 = vweird.f32 %v250
    %vm714 = vweird.f32 %v708
    %vm715 = vmor %vm713, %vm714
    %v716 = vsel %vm715, %v708, %v712
    %v717 = vand.u32 2147483647, %v250
    %vm718 = vcmp.eq.f32.partialorder %v717, 8.507059e+37
    %v719 = vand.u32 %v250, 2147483648
    %v720 = vor.u32 1.1754944e-38, %v719
    %v721 = vsel %vm718, %v720, %v716
    %v722 = vmul.f32 1.0, %v721
    %v723 = vrcp.pop %v251
    %v724 = vmul.f32 %v251, %v723
    %v725 = vsub.f32 1.0, %v724
    %v726 = vmul.f32 %v723, %v725
    %v727 = vadd.f32 %v723, %v726
    %vm728 = vweird.f32 %v251
    %vm729 = vweird.f32 %v723
    %vm730 = vmor %vm728, %vm729
    %v731 = vsel %vm730, %v723, %v727
    %v732 = vand.u32 2147483647, %v251
    %vm733 = vcmp.eq.f32.partialorder %v732, 8.507059e+37
    %v734 = vand.u32 %v251, 2147483648
    %v735 = vor.u32 1.1754944e-38, %v734
    %v736 = vsel %vm733, %v735, %v731
    %v737 = vmul.f32 1.0, %v736
    %v738 = vrcp.pop %v252
    %v739 = vmul.f32 %v252, %v738
    %v740 = vsub.f32 1.0, %v739
    %v741 = vmul.f32 %v738, %v740
    %v742 = vadd.f32 %v738, %v741
    %vm743 = vweird.f32 %v252
    %vm744 = vweird.f32 %v738
    %vm745 = vmor %vm743, %vm744
    %v746 = vsel %vm745, %v738, %v742
    %v747 = vand.u32 2147483647, %v252
    %vm748 = vcmp.eq.f32.partialorder %v747, 8.507059e+37
    %v749 = vand.u32 %v252, 2147483648
    %v750 = vor.u32 1.1754944e-38, %v749
    %v751 = vsel %vm748, %v750, %v746
    %v752 = vmul.f32 1.0, %v751
    %v753 = vrcp.pop %v253
    %v754 = vmul.f32 %v253, %v753
    %v755 = vsub.f32 1.0, %v754
    %v756 = vmul.f32 %v753, %v755
    %v757 = vadd.f32 %v753, %v756
    %vm758 = vweird.f32 %v253
    %vm759 = vweird.f32 %v753
    %vm760 = vmor %vm758, %vm759
    %v761 = vsel %vm760, %v753, %v757
    %v762 = vand.u32 2147483647, %v253
    %vm763 = vcmp.eq.f32.partialorder %v762, 8.507059e+37
    %v764 = vand.u32 %v253, 2147483648
    %v765 = vor.u32 1.1754944e-38, %v764
    %v766 = vsel %vm763, %v765, %v761
    %v767 = vmul.f32 1.0, %v766
    %v768 = vrcp.pop %v254
    %v769 = vmul.f32 %v254, %v768
    %v770 = vsub.f32 1.0, %v769
    %v771 = vmul.f32 %v768, %v770
    %v772 = vadd.f32 %v768, %v771
    %vm773 = vweird.f32 %v254
    %vm774 = vweird.f32 %v768
    %vm775 = vmor %vm773, %vm774
    %v776 = vsel %vm775, %v768, %v772
    %v777 = vand.u32 2147483647, %v254
    %vm778 = vcmp.eq.f32.partialorder %v777, 8.507059e+37
    %v779 = vand.u32 %v254, 2147483648
    %v780 = vor.u32 1.1754944e-38, %v779
    %v781 = vsel %vm778, %v780, %v776
    %v782 = vmul.f32 1.0, %v781
    %v783 = vrcp.pop %v255
    %v784 = vmul.f32 %v255, %v783
    %v785 = vsub.f32 1.0, %v784
    %v786 = vmul.f32 %v783, %v785
    %v787 = vadd.f32 %v783, %v786
    %vm788 = vweird.f32 %v255
    %vm789 = vweird.f32 %v783
    %vm790 = vmor %vm788, %vm789
    %v791 = vsel %vm790, %v783, %v787
    %v792 = vand.u32 2147483647, %v255
    %vm793 = vcmp.eq.f32.partialorder %v792, 8.507059e+37
    %v794 = vand.u32 %v255, 2147483648
    %v795 = vor.u32 1.1754944e-38, %v794
    %v796 = vsel %vm793, %v795, %v791
    %v797 = vmul.f32 1.0, %v796
    %v798 = vrcp.pop %v256
    %v799 = vmul.f32 %v256, %v798
    %v800 = vsub.f32 1.0, %v799
    %v801 = vmul.f32 %v798, %v800
    %v802 = vadd.f32 %v798, %v801
    %vm803 = vweird.f32 %v256
    %vm804 = vweird.f32 %v798
    %vm805 = vmor %vm803, %vm804
    %v806 = vsel %vm805, %v798, %v802
    %v807 = vand.u32 2147483647, %v256
    %vm808 = vcmp.eq.f32.partialorder %v807, 8.507059e+37
    %v809 = vand.u32 %v256, 2147483648
    %v810 = vor.u32 1.1754944e-38, %v809
    %v811 = vsel %vm808, %v810, %v806
    %v812 = vmul.f32 1.0, %v811
    %v813 = vrcp.pop %v257
    %v814 = vmul.f32 %v257, %v813
    %v815 = vsub.f32 1.0, %v814
    %v816 = vmul.f32 %v813, %v815
    %v817 = vadd.f32 %v813, %v816
    %vm818 = vweird.f32 %v257
    %vm819 = vweird.f32 %v813
    %vm820 = vmor %vm818, %vm819
    %v821 = vsel %vm820, %v813, %v817
    %v822 = vand.u32 2147483647, %v257
    %vm823 = vcmp.eq.f32.partialorder %v822, 8.507059e+37
    %v824 = vand.u32 %v257, 2147483648
    %v825 = vor.u32 1.1754944e-38, %v824
    %v826 = vsel %vm823, %v825, %v821
    %v827 = vmul.f32 1.0, %v826
    %v828 = vmul.f32 %v68, %v272
    %v829 = vmul.f32 %v69, %v287
    %v830 = vmul.f32 %v70, %v302
    %v831 = vmul.f32 %v71, %v317
    %v832 = vmul.f32 %v72, %v332
    %v833 = vmul.f32 %v73, %v347
    %v834 = vmul.f32 %v74, %v362
    %v835 = vmul.f32 %v75, %v377
    %v836 = vmul.f32 %v76, %v392
    %v837 = vmul.f32 %v77, %v407
    %v838 = vmul.f32 %v78, %v422
    %v839 = vmul.f32 %v79, %v437
    %v840 = vmul.f32 %v80, %v452
    %v841 = vmul.f32 %v81, %v467
    %v842 = vmul.f32 %v82, %v482
    %v843 = vmul.f32 %v83, %v497
    %v844 = vmul.f32 %v84, %v512
    %v845 = vmul.f32 %v85, %v527
    %v846 = vmul.f32 %v86, %v542
    %v847 = vmul.f32 %v87, %v557
    %v848 = vmul.f32 %v88, %v572
    %v849 = vmul.f32 %v89, %v587
    %v850 = vmul.f32 %v90, %v602
    %v851 = vmul.f32 %v91, %v617
    %v852 = vmul.f32 %v92, %v632
    %v853 = vmul.f32 %v93, %v647
    %v854 = vmul.f32 %v94, %v662
    %v855 = vmul.f32 %v95, %v677
    %v856 = vmul.f32 %v96, %v692
    %v857 = vmul.f32 %v97, %v707
    %v858 = vmul.f32 %v98, %v722
    %v859 = vmul.f32 %v99, %v737
    %v860 = vmul.f32 %v100, %v752
    %v861 = vmul.f32 %v101, %v767
    %v862 = vmul.f32 %v102, %v782
    %v863 = vmul.f32 %v103, %v797
    %v864 = vmul.f32 %v104, %v812
    %v865 = vmul.f32 %v105, %v827
    %v866 = vld [vmem:[%s2] sm:$0xff]
    %v867 = vld [vmem:[%s2 + $0x8] sm:$0xff]
    %v868 = vld [vmem:[%s2 + $0x10] sm:$0xff]
    %v869 = vld [vmem:[%s2 + $0x18] sm:$0xff]
    %v870 = vld [vmem:[%s3] sm:$0x1]
    %v872 = vperm.slane %v870, 0
    %vm874 = vcmask 261120
    %v876 = vsel %vm874, %v828, 0
    %v879 = vsel %vm874, %v829, 0
    %v882 = vsel %vm874, %v830, 0
    %v885 = vsel %vm874, %v831, 0
    %v888 = vsel %vm874, %v832, 0
    %v891 = vsel %vm874, %v833, 0
    %v894 = vsel %vm874, %v834, 0
    %v897 = vsel %vm874, %v835, 0
    %v900 = vsel %vm874, %v836, 0
    %v903 = vsel %vm874, %v837, 0
    %v906 = vsel %vm874, %v838, 0
    %v909 = vsel %vm874, %v839, 0
    %v912 = vsel %vm874, %v840, 0
    %v915 = vsel %vm874, %v841, 0
    %v918 = vsel %vm874, %v842, 0
    %v921 = vsel %vm874, %v843, 0
    %v924 = vsel %vm874, %v844, 0
    %v927 = vsel %vm874, %v845, 0
    %v930 = vsel %vm874, %v846, 0
    %v933 = vsel %vm874, %v847, 0
    %v936 = vsel %vm874, %v848, 0
    %v939 = vsel %vm874, %v849, 0
    %v942 = vsel %vm874, %v850, 0
    %v945 = vsel %vm874, %v851, 0
    %v948 = vsel %vm874, %v852, 0
    %v951 = vsel %vm874, %v853, 0
    %v954 = vsel %vm874, %v854, 0
    %v957 = vsel %vm874, %v855, 0
    %v960 = vsel %vm874, %v856, 0
    %v963 = vsel %vm874, %v857, 0
    %v966 = vsel %vm874, %v858, 0
    %v969 = vsel %vm874, %v859, 0
    %v972 = vsel %vm874, %v860, 0
    %v975 = vsel %vm874, %v861, 0
    %v978 = vsel %vm874, %v862, 0
    %v981 = vsel %vm874, %v863, 0
    %v984 = vsel %vm874, %v864, 0
    %v987 = vsel %vm874, %v865, 0
    %989 = vmatpush.msra.mxu0 0.0
    %990 = vmatpush.msra.mxu0 0.0
    %991 = vmatpush.msra.mxu0 0.0
    %992 = vmatpush.msra.mxu0 0.0
    %993 = vmatpush.msra.mxu0 0.0
    %994 = vmatpush.msra.mxu0 0.0
    %995 = vmatpush.msra.mxu0 0.0
    %996 = vmatpush.msra.mxu0 0.0
    %997 = vmatpush.msra.mxu0 0.0
    %998 = vmatpush.msra.mxu0 0.0
    %999 = vmatpush.msra.mxu0 0.0
    %1000 = vmatpush.msra.mxu0 0.0
    %1001 = vmatpush.msra.mxu0 %v869
    %1002 = vmatpush.msra.mxu0 %v868
    %1003 = vmatpush.msra.mxu0 %v867
    %1004 = vmatpush.msra.mxu0 %v866
    %1005 = vmatmul.f32.gmra.mxu0 %v876
    %v1006 = vpop.f32.mrf.mxu0
    %v1007 = vadd.f32 %v872, %v1006
    %1008 = vmatmul.f32.gmra.mxu0 %v879
    %v1009 = vpop.f32.mrf.mxu0
    %v1010 = vadd.f32 %v872, %v1009
    %1011 = vmatmul.f32.gmra.mxu0 %v882
    %v1012 = vpop.f32.mrf.mxu0
    %v1013 = vadd.f32 %v872, %v1012
    %1014 = vmatmul.f32.gmra.mxu0 %v885
    %v1015 = vpop.f32.mrf.mxu0
    %v1016 = vadd.f32 %v872, %v1015
    %1017 = vmatmul.f32.gmra.mxu0 %v888
    %v1018 = vpop.f32.mrf.mxu0
    %v1019 = vadd.f32 %v872, %v1018
    %1020 = vmatmul.f32.gmra.mxu0 %v891
    %v1021 = vpop.f32.mrf.mxu0
    %v1022 = vadd.f32 %v872, %v1021
    %1023 = vmatmul.f32.gmra.mxu0 %v894
    %v1024 = vpop.f32.mrf.mxu0
    %v1025 = vadd.f32 %v872, %v1024
    %1026 = vmatmul.f32.gmra.mxu0 %v897
    %v1027 = vpop.f32.mrf.mxu0
    %v1028 = vadd.f32 %v872, %v1027
    %1029 = vmatmul.f32.gmra.mxu0 %v900
    %v1030 = vpop.f32.mrf.mxu0
    %v1031 = vadd.f32 %v872, %v1030
    %1032 = vmatmul.f32.gmra.mxu0 %v903
    %v1033 = vpop.f32.mrf.mxu0
    %v1034 = vadd.f32 %v872, %v1033
    %1035 = vmatmul.f32.gmra.mxu0 %v906
    %v1036 = vpop.f32.mrf.mxu0
    %v1037 = vadd.f32 %v872, %v1036
    %1038 = vmatmul.f32.gmra.mxu0 %v909
    %v1039 = vpop.f32.mrf.mxu0
    %v1040 = vadd.f32 %v872, %v1039
    %1041 = vmatmul.f32.gmra.mxu0 %v912
    %v1042 = vpop.f32.mrf.mxu0
    %v1043 = vadd.f32 %v872, %v1042
    %1044 = vmatmul.f32.gmra.mxu0 %v915
    %v1045 = vpop.f32.mrf.mxu0
    %v1046 = vadd.f32 %v872, %v1045
    %1047 = vmatmul.f32.gmra.mxu0 %v918
    %v1048 = vpop.f32.mrf.mxu0
    %v1049 = vadd.f32 %v872, %v1048
    %1050 = vmatmul.f32.gmra.mxu0 %v921
    %v1051 = vpop.f32.mrf.mxu0
    %v1052 = vadd.f32 %v872, %v1051
    %1053 = vmatmul.f32.gmra.mxu0 %v924
    %v1054 = vpop.f32.mrf.mxu0
    %v1055 = vadd.f32 %v872, %v1054
    %1056 = vmatmul.f32.gmra.mxu0 %v927
    %v1057 = vpop.f32.mrf.mxu0
    %v1058 = vadd.f32 %v872, %v1057
    %1059 = vmatmul.f32.gmra.mxu0 %v930
    %v1060 = vpop.f32.mrf.mxu0
    %v1061 = vadd.f32 %v872, %v1060
    %1062 = vmatmul.f32.gmra.mxu0 %v933
    %v1063 = vpop.f32.mrf.mxu0
    %v1064 = vadd.f32 %v872, %v1063
    %1065 = vmatmul.f32.gmra.mxu0 %v936
    %v1066 = vpop.f32.mrf.mxu0
    %v1067 = vadd.f32 %v872, %v1066
    %1068 = vmatmul.f32.gmra.mxu0 %v939
    %v1069 = vpop.f32.mrf.mxu0
    %v1070 = vadd.f32 %v872, %v1069
    %1071 = vmatmul.f32.gmra.mxu0 %v942
    %v1072 = vpop.f32.mrf.mxu0
    %v1073 = vadd.f32 %v872, %v1072
    %1074 = vmatmul.f32.gmra.mxu0 %v945
    %v1075 = vpop.f32.mrf.mxu0
    %v1076 = vadd.f32 %v872, %v1075
    %1077 = vmatmul.f32.gmra.mxu0 %v948
    %v1078 = vpop.f32.mrf.mxu0
    %v1079 = vadd.f32 %v872, %v1078
    %1080 = vmatmul.f32.gmra.mxu0 %v951
    %v1081 = vpop.f32.mrf.mxu0
    %v1082 = vadd.f32 %v872, %v1081
    %1083 = vmatmul.f32.gmra.mxu0 %v954
    %v1084 = vpop.f32.mrf.mxu0
    %v1085 = vadd.f32 %v872, %v1084
    %1086 = vmatmul.f32.gmra.mxu0 %v957
    %v1087 = vpop.f32.mrf.mxu0
    %v1088 = vadd.f32 %v872, %v1087
    %1089 = vmatmul.f32.gmra.mxu0 %v960
    %v1090 = vpop.f32.mrf.mxu0
    %v1091 = vadd.f32 %v872, %v1090
    %1092 = vmatmul.f32.gmra.mxu0 %v963
    %v1093 = vpop.f32.mrf.mxu0
    %v1094 = vadd.f32 %v872, %v1093
    %1095 = vmatmul.f32.gmra.mxu0 %v966
    %v1096 = vpop.f32.mrf.mxu0
    %v1097 = vadd.f32 %v872, %v1096
    %1098 = vmatmul.f32.gmra.mxu0 %v969
    %v1099 = vpop.f32.mrf.mxu0
    %v1100 = vadd.f32 %v872, %v1099
    %1101 = vmatmul.f32.gmra.mxu0 %v972
    %v1102 = vpop.f32.mrf.mxu0
    %v1103 = vadd.f32 %v872, %v1102
    %1104 = vmatmul.f32.gmra.mxu0 %v975
    %v1105 = vpop.f32.mrf.mxu0
    %v1106 = vadd.f32 %v872, %v1105
    %1107 = vmatmul.f32.gmra.mxu0 %v978
    %v1108 = vpop.f32.mrf.mxu0
    %v1109 = vadd.f32 %v872, %v1108
    %1110 = vmatmul.f32.gmra.mxu0 %v981
    %v1111 = vpop.f32.mrf.mxu0
    %v1112 = vadd.f32 %v872, %v1111
    %1113 = vmatmul.f32.gmra.mxu0 %v984
    %v1114 = vpop.f32.mrf.mxu0
    %v1115 = vadd.f32 %v872, %v1114
    %1116 = vmatmul.f32.gmra.mxu0 %v987
    %v1117 = vpop.f32.mrf.mxu0
    %v1118 = vadd.f32 %v872, %v1117
    %1119 = vdwg.mxu0
    %v1120 = vld [vmem:[%s4] sm:$0xff]
    %v1121 = vld [vmem:[%s4 + $0x8] sm:$0xff]
    %v1122 = vld [vmem:[%s4 + $0x10] sm:$0xff]
    %v1123 = vld [vmem:[%s4 + $0x18] sm:$0xff]
    %v1124 = vld [vmem:[%s5] sm:$0x1]
    %v1126 = vperm.slane %v1124, 0
    %1128 = vmatpush.msra.mxu0 0.0
    %1129 = vmatpush.msra.mxu0 0.0
    %1130 = vmatpush.msra.mxu0 0.0
    %1131 = vmatpush.msra.mxu0 0.0
    %1132 = vmatpush.msra.mxu0 0.0
    %1133 = vmatpush.msra.mxu0 0.0
    %1134 = vmatpush.msra.mxu0 0.0
    %1135 = vmatpush.msra.mxu0 0.0
    %1136 = vmatpush.msra.mxu0 0.0
    %1137 = vmatpush.msra.mxu0 0.0
    %1138 = vmatpush.msra.mxu0 0.0
    %1139 = vmatpush.msra.mxu0 0.0
    %1140 = vmatpush.msra.mxu0 %v1123
    %1141 = vmatpush.msra.mxu0 %v1122
    %1142 = vmatpush.msra.mxu0 %v1121
    %1143 = vmatpush.msra.mxu0 %v1120
    %1144 = vmatmul.f32.gmra.mxu0 %v876
    %v1145 = vpop.f32.mrf.mxu0
    %v1146 = vadd.f32 %v1126, %v1145
    %1147 = vmatmul.f32.gmra.mxu0 %v879
    %v1148 = vpop.f32.mrf.mxu0
    %v1149 = vadd.f32 %v1126, %v1148
    %1150 = vmatmul.f32.gmra.mxu0 %v882
    %v1151 = vpop.f32.mrf.mxu0
    %v1152 = vadd.f32 %v1126, %v1151
    %1153 = vmatmul.f32.gmra.mxu0 %v885
    %v1154 = vpop.f32.mrf.mxu0
    %v1155 = vadd.f32 %v1126, %v1154
    %1156 = vmatmul.f32.gmra.mxu0 %v888
    %v1157 = vpop.f32.mrf.mxu0
    %v1158 = vadd.f32 %v1126, %v1157
    %1159 = vmatmul.f32.gmra.mxu0 %v891
    %v1160 = vpop.f32.mrf.mxu0
    %v1161 = vadd.f32 %v1126, %v1160
    %1162 = vmatmul.f32.gmra.mxu0 %v894
    %v1163 = vpop.f32.mrf.mxu0
    %v1164 = vadd.f32 %v1126, %v1163
    %1165 = vmatmul.f32.gmra.mxu0 %v897
    %v1166 = vpop.f32.mrf.mxu0
    %v1167 = vadd.f32 %v1126, %v1166
    %1168 = vmatmul.f32.gmra.mxu0 %v900
    %v1169 = vpop.f32.mrf.mxu0
    %v1170 = vadd.f32 %v1126, %v1169
    %1171 = vmatmul.f32.gmra.mxu0 %v903
    %v1172 = vpop.f32.mrf.mxu0
    %v1173 = vadd.f32 %v1126, %v1172
    %1174 = vmatmul.f32.gmra.mxu0 %v906
    %v1175 = vpop.f32.mrf.mxu0
    %v1176 = vadd.f32 %v1126, %v1175
    %1177 = vmatmul.f32.gmra.mxu0 %v909
    %v1178 = vpop.f32.mrf.mxu0
    %v1179 = vadd.f32 %v1126, %v1178
    %1180 = vmatmul.f32.gmra.mxu0 %v912
    %v1181 = vpop.f32.mrf.mxu0
    %v1182 = vadd.f32 %v1126, %v1181
    %1183 = vmatmul.f32.gmra.mxu0 %v915
    %v1184 = vpop.f32.mrf.mxu0
    %v1185 = vadd.f32 %v1126, %v1184
    %1186 = vmatmul.f32.gmra.mxu0 %v918
    %v1187 = vpop.f32.mrf.mxu0
    %v1188 = vadd.f32 %v1126, %v1187
    %1189 = vmatmul.f32.gmra.mxu0 %v921
    %v1190 = vpop.f32.mrf.mxu0
    %v1191 = vadd.f32 %v1126, %v1190
    %1192 = vmatmul.f32.gmra.mxu0 %v924
    %v1193 = vpop.f32.mrf.mxu0
    %v1194 = vadd.f32 %v1126, %v1193
    %1195 = vmatmul.f32.gmra.mxu0 %v927
    %v1196 = vpop.f32.mrf.mxu0
    %v1197 = vadd.f32 %v1126, %v1196
    %1198 = vmatmul.f32.gmra.mxu0 %v930
    %v1199 = vpop.f32.mrf.mxu0
    %v1200 = vadd.f32 %v1126, %v1199
    %1201 = vmatmul.f32.gmra.mxu0 %v933
    %v1202 = vpop.f32.mrf.mxu0
    %v1203 = vadd.f32 %v1126, %v1202
    %1204 = vmatmul.f32.gmra.mxu0 %v936
    %v1205 = vpop.f32.mrf.mxu0
    %v1206 = vadd.f32 %v1126, %v1205
    %1207 = vmatmul.f32.gmra.mxu0 %v939
    %v1208 = vpop.f32.mrf.mxu0
    %v1209 = vadd.f32 %v1126, %v1208
    %1210 = vmatmul.f32.gmra.mxu0 %v942
    %v1211 = vpop.f32.mrf.mxu0
    %v1212 = vadd.f32 %v1126, %v1211
    %1213 = vmatmul.f32.gmra.mxu0 %v945
    %v1214 = vpop.f32.mrf.mxu0
    %v1215 = vadd.f32 %v1126, %v1214
    %1216 = vmatmul.f32.gmra.mxu0 %v948
    %v1217 = vpop.f32.mrf.mxu0
    %v1218 = vadd.f32 %v1126, %v1217
    %1219 = vmatmul.f32.gmra.mxu0 %v951
    %v1220 = vpop.f32.mrf.mxu0
    %v1221 = vadd.f32 %v1126, %v1220
    %1222 = vmatmul.f32.gmra.mxu0 %v954
    %v1223 = vpop.f32.mrf.mxu0
    %v1224 = vadd.f32 %v1126, %v1223
    %1225 = vmatmul.f32.gmra.mxu0 %v957
    %v1226 = vpop.f32.mrf.mxu0
    %v1227 = vadd.f32 %v1126, %v1226
    %1228 = vmatmul.f32.gmra.mxu0 %v960
    %v1229 = vpop.f32.mrf.mxu0
    %v1230 = vadd.f32 %v1126, %v1229
    %1231 = vmatmul.f32.gmra.mxu0 %v963
    %v1232 = vpop.f32.mrf.mxu0
    %v1233 = vadd.f32 %v1126, %v1232
    %1234 = vmatmul.f32.gmra.mxu0 %v966
    %v1235 = vpop.f32.mrf.mxu0
    %v1236 = vadd.f32 %v1126, %v1235
    %1237 = vmatmul.f32.gmra.mxu0 %v969
    %v1238 = vpop.f32.mrf.mxu0
    %v1239 = vadd.f32 %v1126, %v1238
    %1240 = vmatmul.f32.gmra.mxu0 %v972
    %v1241 = vpop.f32.mrf.mxu0
    %v1242 = vadd.f32 %v1126, %v1241
    %1243 = vmatmul.f32.gmra.mxu0 %v975
    %v1244 = vpop.f32.mrf.mxu0
    %v1245 = vadd.f32 %v1126, %v1244
    %1246 = vmatmul.f32.gmra.mxu0 %v978
    %v1247 = vpop.f32.mrf.mxu0
    %v1248 = vadd.f32 %v1126, %v1247
    %1249 = vmatmul.f32.gmra.mxu0 %v981
    %v1250 = vpop.f32.mrf.mxu0
    %v1251 = vadd.f32 %v1126, %v1250
    %1252 = vmatmul.f32.gmra.mxu0 %v984
    %v1253 = vpop.f32.mrf.mxu0
    %v1254 = vadd.f32 %v1126, %v1253
    %1255 = vmatmul.f32.gmra.mxu0 %v987
    %v1256 = vpop.f32.mrf.mxu0
    %v1257 = vadd.f32 %v1126, %v1256
    %1258 = vdwg.mxu0
    %v1259 = vsel %vm874, %v30, 0.0
    %1260 = vadd.xlane.f32.xlu0 %v1259
    %v1261 = vpop.xlane.xlu0 %1260
    %v1262 = vsel %vm874, %v31, 0.0
    %1263 = vadd.xlane.f32.xlu0 %v1262
    %v1264 = vpop.xlane.xlu0 %1263
    %v1265 = vsel %vm874, %v32, 0.0
    %1266 = vadd.xlane.f32.xlu0 %v1265
    %v1267 = vpop.xlane.xlu0 %1266
    %v1268 = vsel %vm874, %v33, 0.0
    %1269 = vadd.xlane.f32.xlu0 %v1268
    %v1270 = vpop.xlane.xlu0 %1269
    %v1271 = vsel %vm874, %v34, 0.0
    %1272 = vadd.xlane.f32.xlu0 %v1271
    %v1273 = vpop.xlane.xlu0 %1272
    %v1274 = vsel %vm874, %v35, 0.0
    %1275 = vadd.xlane.f32.xlu0 %v1274
    %v1276 = vpop.xlane.xlu0 %1275
    %v1277 = vsel %vm874, %v36, 0.0
    %1278 = vadd.xlane.f32.xlu0 %v1277
    %v1279 = vpop.xlane.xlu0 %1278
    %v1280 = vsel %vm874, %v37, 0.0
    %1281 = vadd.xlane.f32.xlu0 %v1280
    %v1282 = vpop.xlane.xlu0 %1281
    %v1283 = vsel %vm874, %v38, 0.0
    %1284 = vadd.xlane.f32.xlu0 %v1283
    %v1285 = vpop.xlane.xlu0 %1284
    %v1286 = vsel %vm874, %v39, 0.0
    %1287 = vadd.xlane.f32.xlu0 %v1286
    %v1288 = vpop.xlane.xlu0 %1287
    %v1289 = vsel %vm874, %v40, 0.0
    %1290 = vadd.xlane.f32.xlu0 %v1289
    %v1291 = vpop.xlane.xlu0 %1290
    %v1292 = vsel %vm874, %v41, 0.0
    %1293 = vadd.xlane.f32.xlu0 %v1292
    %v1294 = vpop.xlane.xlu0 %1293
    %v1295 = vsel %vm874, %v42, 0.0
    %1296 = vadd.xlane.f32.xlu0 %v1295
    %v1297 = vpop.xlane.xlu0 %1296
    %v1298 = vsel %vm874, %v43, 0.0
    %1299 = vadd.xlane.f32.xlu0 %v1298
    %v1300 = vpop.xlane.xlu0 %1299
    %v1301 = vsel %vm874, %v44, 0.0
    %1302 = vadd.xlane.f32.xlu0 %v1301
    %v1303 = vpop.xlane.xlu0 %1302
    %v1304 = vsel %vm874, %v45, 0.0
    %1305 = vadd.xlane.f32.xlu0 %v1304
    %v1306 = vpop.xlane.xlu0 %1305
    %v1307 = vsel %vm874, %v46, 0.0
    %1308 = vadd.xlane.f32.xlu0 %v1307
    %v1309 = vpop.xlane.xlu0 %1308
    %v1310 = vsel %vm874, %v47, 0.0
    %1311 = vadd.xlane.f32.xlu0 %v1310
    %v1312 = vpop.xlane.xlu0 %1311
    %v1313 = vsel %vm874, %v48, 0.0
    %1314 = vadd.xlane.f32.xlu0 %v1313
    %v1315 = vpop.xlane.xlu0 %1314
    %v1316 = vsel %vm874, %v49, 0.0
    %1317 = vadd.xlane.f32.xlu0 %v1316
    %v1318 = vpop.xlane.xlu0 %1317
    %v1319 = vsel %vm874, %v50, 0.0
    %1320 = vadd.xlane.f32.xlu0 %v1319
    %v1321 = vpop.xlane.xlu0 %1320
    %v1322 = vsel %vm874, %v51, 0.0
    %1323 = vadd.xlane.f32.xlu0 %v1322
    %v1324 = vpop.xlane.xlu0 %1323
    %v1325 = vsel %vm874, %v52, 0.0
    %1326 = vadd.xlane.f32.xlu0 %v1325
    %v1327 = vpop.xlane.xlu0 %1326
    %v1328 = vsel %vm874, %v53, 0.0
    %1329 = vadd.xlane.f32.xlu0 %v1328
    %v1330 = vpop.xlane.xlu0 %1329
    %v1331 = vsel %vm874, %v54, 0.0
    %1332 = vadd.xlane.f32.xlu0 %v1331
    %v1333 = vpop.xlane.xlu0 %1332
    %v1334 = vsel %vm874, %v55, 0.0
    %1335 = vadd.xlane.f32.xlu0 %v1334
    %v1336 = vpop.xlane.xlu0 %1335
    %v1337 = vsel %vm874, %v56, 0.0
    %1338 = vadd.xlane.f32.xlu0 %v1337
    %v1339 = vpop.xlane.xlu0 %1338
    %v1340 = vsel %vm874, %v57, 0.0
    %1341 = vadd.xlane.f32.xlu0 %v1340
    %v1342 = vpop.xlane.xlu0 %1341
    %v1343 = vsel %vm874, %v58, 0.0
    %1344 = vadd.xlane.f32.xlu0 %v1343
    %v1345 = vpop.xlane.xlu0 %1344
    %v1346 = vsel %vm874, %v59, 0.0
    %1347 = vadd.xlane.f32.xlu0 %v1346
    %v1348 = vpop.xlane.xlu0 %1347
    %v1349 = vsel %vm874, %v60, 0.0
    %1350 = vadd.xlane.f32.xlu0 %v1349
    %v1351 = vpop.xlane.xlu0 %1350
    %v1352 = vsel %vm874, %v61, 0.0
    %1353 = vadd.xlane.f32.xlu0 %v1352
    %v1354 = vpop.xlane.xlu0 %1353
    %v1355 = vsel %vm874, %v62, 0.0
    %1356 = vadd.xlane.f32.xlu0 %v1355
    %v1357 = vpop.xlane.xlu0 %1356
    %v1358 = vsel %vm874, %v63, 0.0
    %1359 = vadd.xlane.f32.xlu0 %v1358
    %v1360 = vpop.xlane.xlu0 %1359
    %v1361 = vsel %vm874, %v64, 0.0
    %1362 = vadd.xlane.f32.xlu0 %v1361
    %v1363 = vpop.xlane.xlu0 %1362
    %v1364 = vsel %vm874, %v65, 0.0
    %1365 = vadd.xlane.f32.xlu0 %v1364
    %v1366 = vpop.xlane.xlu0 %1365
    %v1367 = vsel %vm874, %v66, 0.0
    %1368 = vadd.xlane.f32.xlu0 %v1367
    %v1369 = vpop.xlane.xlu0 %1368
    %v1370 = vsel %vm874, %v67, 0.0
    %1371 = vadd.xlane.f32.xlu0 %v1370
    %v1372 = vpop.xlane.xlu0 %1371
    %v1373 = vrcp.pop 32.0
    %v1374 = vmul.f32 32.0, %v1373
    %v1375 = vsub.f32 1.0, %v1374
    %v1376 = vmul.f32 %v1373, %v1375
    %v1377 = vadd.f32 %v1373, %v1376
    %vm1378 = vweird.f32 %v1373
    %v1379 = vsel %vm1378, %v1373, %v1377
    %v1380 = vmul.f32 %v1261, %v1379
    %v1381 = vmul.f32 %v1264, %v1379
    %v1382 = vmul.f32 %v1267, %v1379
    %v1383 = vmul.f32 %v1270, %v1379
    %v1384 = vmul.f32 %v1273, %v1379
    %v1385 = vmul.f32 %v1276, %v1379
    %v1386 = vmul.f32 %v1279, %v1379
    %v1387 = vmul.f32 %v1282, %v1379
    %v1388 = vmul.f32 %v1285, %v1379
    %v1389 = vmul.f32 %v1288, %v1379
    %v1390 = vmul.f32 %v1291, %v1379
    %v1391 = vmul.f32 %v1294, %v1379
    %v1392 = vmul.f32 %v1297, %v1379
    %v1393 = vmul.f32 %v1300, %v1379
    %v1394 = vmul.f32 %v1303, %v1379
    %v1395 = vmul.f32 %v1306, %v1379
    %v1396 = vmul.f32 %v1309, %v1379
    %v1397 = vmul.f32 %v1312, %v1379
    %v1398 = vmul.f32 %v1315, %v1379
    %v1399 = vmul.f32 %v1318, %v1379
    %v1400 = vmul.f32 %v1321, %v1379
    %v1401 = vmul.f32 %v1324, %v1379
    %v1402 = vmul.f32 %v1327, %v1379
    %v1403 = vmul.f32 %v1330, %v1379
    %v1404 = vmul.f32 %v1333, %v1379
    %v1405 = vmul.f32 %v1336, %v1379
    %v1406 = vmul.f32 %v1339, %v1379
    %v1407 = vmul.f32 %v1342, %v1379
    %v1408 = vmul.f32 %v1345, %v1379
    %v1409 = vmul.f32 %v1348, %v1379
    %v1410 = vmul.f32 %v1351, %v1379
    %v1411 = vmul.f32 %v1354, %v1379
    %v1412 = vmul.f32 %v1357, %v1379
    %v1413 = vmul.f32 %v1360, %v1379
    %v1414 = vmul.f32 %v1363, %v1379
    %v1415 = vmul.f32 %v1366, %v1379
    %v1416 = vmul.f32 %v1369, %v1379
    %v1417 = vmul.f32 %v1372, %v1379
    %v1418 = vsub.f32 %v30, %v1380
    %v1419 = vsub.f32 %v31, %v1381
    %v1420 = vsub.f32 %v32, %v1382
    %v1421 = vsub.f32 %v33, %v1383
    %v1422 = vsub.f32 %v34, %v1384
    %v1423 = vsub.f32 %v35, %v1385
    %v1424 = vsub.f32 %v36, %v1386
    %v1425 = vsub.f32 %v37, %v1387
    %v1426 = vsub.f32 %v38, %v1388
    %v1427 = vsub.f32 %v39, %v1389
    %v1428 = vsub.f32 %v40, %v1390
    %v1429 = vsub.f32 %v41, %v1391
    %v1430 = vsub.f32 %v42, %v1392
    %v1431 = vsub.f32 %v43, %v1393
    %v1432 = vsub.f32 %v44, %v1394
    %v1433 = vsub.f32 %v45, %v1395
    %v1434 = vsub.f32 %v46, %v1396
    %v1435 = vsub.f32 %v47, %v1397
    %v1436 = vsub.f32 %v48, %v1398
    %v1437 = vsub.f32 %v49, %v1399
    %v1438 = vsub.f32 %v50, %v1400
    %v1439 = vsub.f32 %v51, %v1401
    %v1440 = vsub.f32 %v52, %v1402
    %v1441 = vsub.f32 %v53, %v1403
    %v1442 = vsub.f32 %v54, %v1404
    %v1443 = vsub.f32 %v55, %v1405
    %v1444 = vsub.f32 %v56, %v1406
    %v1445 = vsub.f32 %v57, %v1407
    %v1446 = vsub.f32 %v58, %v1408
    %v1447 = vsub.f32 %v59, %v1409
    %v1448 = vsub.f32 %v60, %v1410
    %v1449 = vsub.f32 %v61, %v1411
    %v1450 = vsub.f32 %v62, %v1412
    %v1451 = vsub.f32 %v63, %v1413
    %v1452 = vsub.f32 %v64, %v1414
    %v1453 = vsub.f32 %v65, %v1415
    %v1454 = vsub.f32 %v66, %v1416
    %v1455 = vsub.f32 %v67, %v1417
    %v1456 = vmul.f32 %v1418, %v1418
    %v1457 = vmul.f32 %v1419, %v1419
    %v1458 = vmul.f32 %v1420, %v1420
    %v1459 = vmul.f32 %v1421, %v1421
    %v1460 = vmul.f32 %v1422, %v1422
    %v1461 = vmul.f32 %v1423, %v1423
    %v1462 = vmul.f32 %v1424, %v1424
    %v1463 = vmul.f32 %v1425, %v1425
    %v1464 = vmul.f32 %v1426, %v1426
    %v1465 = vmul.f32 %v1427, %v1427
    %v1466 = vmul.f32 %v1428, %v1428
    %v1467 = vmul.f32 %v1429, %v1429
    %v1468 = vmul.f32 %v1430, %v1430
    %v1469 = vmul.f32 %v1431, %v1431
    %v1470 = vmul.f32 %v1432, %v1432
    %v1471 = vmul.f32 %v1433, %v1433
    %v1472 = vmul.f32 %v1434, %v1434
    %v1473 = vmul.f32 %v1435, %v1435
    %v1474 = vmul.f32 %v1436, %v1436
    %v1475 = vmul.f32 %v1437, %v1437
    %v1476 = vmul.f32 %v1438, %v1438
    %v1477 = vmul.f32 %v1439, %v1439
    %v1478 = vmul.f32 %v1440, %v1440
    %v1479 = vmul.f32 %v1441, %v1441
    %v1480 = vmul.f32 %v1442, %v1442
    %v1481 = vmul.f32 %v1443, %v1443
    %v1482 = vmul.f32 %v1444, %v1444
    %v1483 = vmul.f32 %v1445, %v1445
    %v1484 = vmul.f32 %v1446, %v1446
    %v1485 = vmul.f32 %v1447, %v1447
    %v1486 = vmul.f32 %v1448, %v1448
    %v1487 = vmul.f32 %v1449, %v1449
    %v1488 = vmul.f32 %v1450, %v1450
    %v1489 = vmul.f32 %v1451, %v1451
    %v1490 = vmul.f32 %v1452, %v1452
    %v1491 = vmul.f32 %v1453, %v1453
    %v1492 = vmul.f32 %v1454, %v1454
    %v1493 = vmul.f32 %v1455, %v1455
    %v1494 = vsel %vm874, %v1456, 0.0
    %1495 = vadd.xlane.f32.xlu0 %v1494
    %v1496 = vpop.xlane.xlu0 %1495
    %v1497 = vsel %vm874, %v1457, 0.0
    %1498 = vadd.xlane.f32.xlu0 %v1497
    %v1499 = vpop.xlane.xlu0 %1498
    %v1500 = vsel %vm874, %v1458, 0.0
    %1501 = vadd.xlane.f32.xlu0 %v1500
    %v1502 = vpop.xlane.xlu0 %1501
    %v1503 = vsel %vm874, %v1459, 0.0
    %1504 = vadd.xlane.f32.xlu0 %v1503
    %v1505 = vpop.xlane.xlu0 %1504
    %v1506 = vsel %vm874, %v1460, 0.0
    %1507 = vadd.xlane.f32.xlu0 %v1506
    %v1508 = vpop.xlane.xlu0 %1507
    %v1509 = vsel %vm874, %v1461, 0.0
    %1510 = vadd.xlane.f32.xlu0 %v1509
    %v1511 = vpop.xlane.xlu0 %1510
    %v1512 = vsel %vm874, %v1462, 0.0
    %1513 = vadd.xlane.f32.xlu0 %v1512
    %v1514 = vpop.xlane.xlu0 %1513
    %v1515 = vsel %vm874, %v1463, 0.0
    %1516 = vadd.xlane.f32.xlu0 %v1515
    %v1517 = vpop.xlane.xlu0 %1516
    %v1518 = vsel %vm874, %v1464, 0.0
    %1519 = vadd.xlane.f32.xlu0 %v1518
    %v1520 = vpop.xlane.xlu0 %1519
    %v1521 = vsel %vm874, %v1465, 0.0
    %1522 = vadd.xlane.f32.xlu0 %v1521
    %v1523 = vpop.xlane.xlu0 %1522
    %v1524 = vsel %vm874, %v1466, 0.0
    %1525 = vadd.xlane.f32.xlu0 %v1524
    %v1526 = vpop.xlane.xlu0 %1525
    %v1527 = vsel %vm874, %v1467, 0.0
    %1528 = vadd.xlane.f32.xlu0 %v1527
    %v1529 = vpop.xlane.xlu0 %1528
    %v1530 = vsel %vm874, %v1468, 0.0
    %1531 = vadd.xlane.f32.xlu0 %v1530
    %v1532 = vpop.xlane.xlu0 %1531
    %v1533 = vsel %vm874, %v1469, 0.0
    %1534 = vadd.xlane.f32.xlu0 %v1533
    %v1535 = vpop.xlane.xlu0 %1534
    %v1536 = vsel %vm874, %v1470, 0.0
    %1537 = vadd.xlane.f32.xlu0 %v1536
    %v1538 = vpop.xlane.xlu0 %1537
    %v1539 = vsel %vm874, %v1471, 0.0
    %1540 = vadd.xlane.f32.xlu0 %v1539
    %v1541 = vpop.xlane.xlu0 %1540
    %v1542 = vsel %vm874, %v1472, 0.0
    %1543 = vadd.xlane.f32.xlu0 %v1542
    %v1544 = vpop.xlane.xlu0 %1543
    %v1545 = vsel %vm874, %v1473, 0.0
    %1546 = vadd.xlane.f32.xlu0 %v1545
    %v1547 = vpop.xlane.xlu0 %1546
    %v1548 = vsel %vm874, %v1474, 0.0
    %1549 = vadd.xlane.f32.xlu0 %v1548
    %v1550 = vpop.xlane.xlu0 %1549
    %v1551 = vsel %vm874, %v1475, 0.0
    %1552 = vadd.xlane.f32.xlu0 %v1551
    %v1553 = vpop.xlane.xlu0 %1552
    %v1554 = vsel %vm874, %v1476, 0.0
    %1555 = vadd.xlane.f32.xlu0 %v1554
    %v1556 = vpop.xlane.xlu0 %1555
    %v1557 = vsel %vm874, %v1477, 0.0
    %1558 = vadd.xlane.f32.xlu0 %v1557
    %v1559 = vpop.xlane.xlu0 %1558
    %v1560 = vsel %vm874, %v1478, 0.0
    %1561 = vadd.xlane.f32.xlu0 %v1560
    %v1562 = vpop.xlane.xlu0 %1561
    %v1563 = vsel %vm874, %v1479, 0.0
    %1564 = vadd.xlane.f32.xlu0 %v1563
    %v1565 = vpop.xlane.xlu0 %1564
    %v1566 = vsel %vm874, %v1480, 0.0
    %1567 = vadd.xlane.f32.xlu0 %v1566
    %v1568 = vpop.xlane.xlu0 %1567
    %v1569 = vsel %vm874, %v1481, 0.0
    %1570 = vadd.xlane.f32.xlu0 %v1569
    %v1571 = vpop.xlane.xlu0 %1570
    %v1572 = vsel %vm874, %v1482, 0.0
    %1573 = vadd.xlane.f32.xlu0 %v1572
    %v1574 = vpop.xlane.xlu0 %1573
    %v1575 = vsel %vm874, %v1483, 0.0
    %1576 = vadd.xlane.f32.xlu0 %v1575
    %v1577 = vpop.xlane.xlu0 %1576
    %v1578 = vsel %vm874, %v1484, 0.0
    %1579 = vadd.xlane.f32.xlu0 %v1578
    %v1580 = vpop.xlane.xlu0 %1579
    %v1581 = vsel %vm874, %v1485, 0.0
    %1582 = vadd.xlane.f32.xlu0 %v1581
    %v1583 = vpop.xlane.xlu0 %1582
    %v1584 = vsel %vm874, %v1486, 0.0
    %1585 = vadd.xlane.f32.xlu0 %v1584
    %v1586 = vpop.xlane.xlu0 %1585
    %v1587 = vsel %vm874, %v1487, 0.0
    %1588 = vadd.xlane.f32.xlu0 %v1587
    %v1589 = vpop.xlane.xlu0 %1588
    %v1590 = vsel %vm874, %v1488, 0.0
    %1591 = vadd.xlane.f32.xlu0 %v1590
    %v1592 = vpop.xlane.xlu0 %1591
    %v1593 = vsel %vm874, %v1489, 0.0
    %1594 = vadd.xlane.f32.xlu0 %v1593
    %v1595 = vpop.xlane.xlu0 %1594
    %v1596 = vsel %vm874, %v1490, 0.0
    %1597 = vadd.xlane.f32.xlu0 %v1596
    %v1598 = vpop.xlane.xlu0 %1597
    %v1599 = vsel %vm874, %v1491, 0.0
    %1600 = vadd.xlane.f32.xlu0 %v1599
    %v1601 = vpop.xlane.xlu0 %1600
    %v1602 = vsel %vm874, %v1492, 0.0
    %1603 = vadd.xlane.f32.xlu0 %v1602
    %v1604 = vpop.xlane.xlu0 %1603
    %v1605 = vsel %vm874, %v1493, 0.0
    %1606 = vadd.xlane.f32.xlu0 %v1605
    %v1607 = vpop.xlane.xlu0 %1606
    %v1608 = vmul.f32 %v1496, %v1379
    %v1609 = vmul.f32 %v1499, %v1379
    %v1610 = vmul.f32 %v1502, %v1379
    %v1611 = vmul.f32 %v1505, %v1379
    %v1612 = vmul.f32 %v1508, %v1379
    %v1613 = vmul.f32 %v1511, %v1379
    %v1614 = vmul.f32 %v1514, %v1379
    %v1615 = vmul.f32 %v1517, %v1379
    %v1616 = vmul.f32 %v1520, %v1379
    %v1617 = vmul.f32 %v1523, %v1379
    %v1618 = vmul.f32 %v1526, %v1379
    %v1619 = vmul.f32 %v1529, %v1379
    %v1620 = vmul.f32 %v1532, %v1379
    %v1621 = vmul.f32 %v1535, %v1379
    %v1622 = vmul.f32 %v1538, %v1379
    %v1623 = vmul.f32 %v1541, %v1379
    %v1624 = vmul.f32 %v1544, %v1379
    %v1625 = vmul.f32 %v1547, %v1379
    %v1626 = vmul.f32 %v1550, %v1379
    %v1627 = vmul.f32 %v1553, %v1379
    %v1628 = vmul.f32 %v1556, %v1379
    %v1629 = vmul.f32 %v1559, %v1379
    %v1630 = vmul.f32 %v1562, %v1379
    %v1631 = vmul.f32 %v1565, %v1379
    %v1632 = vmul.f32 %v1568, %v1379
    %v1633 = vmul.f32 %v1571, %v1379
    %v1634 = vmul.f32 %v1574, %v1379
    %v1635 = vmul.f32 %v1577, %v1379
    %v1636 = vmul.f32 %v1580, %v1379
    %v1637 = vmul.f32 %v1583, %v1379
    %v1638 = vmul.f32 %v1586, %v1379
    %v1639 = vmul.f32 %v1589, %v1379
    %v1640 = vmul.f32 %v1592, %v1379
    %v1641 = vmul.f32 %v1595, %v1379
    %v1642 = vmul.f32 %v1598, %v1379
    %v1643 = vmul.f32 %v1601, %v1379
    %v1644 = vmul.f32 %v1604, %v1379
    %v1645 = vmul.f32 %v1607, %v1379
    %v1646 = vadd.f32 %v1608, 1e-06
    %v1647 = vadd.f32 %v1609, 1e-06
    %v1648 = vadd.f32 %v1610, 1e-06
    %v1649 = vadd.f32 %v1611, 1e-06
    %v1650 = vadd.f32 %v1612, 1e-06
    %v1651 = vadd.f32 %v1613, 1e-06
    %v1652 = vadd.f32 %v1614, 1e-06
    %v1653 = vadd.f32 %v1615, 1e-06
    %v1654 = vadd.f32 %v1616, 1e-06
    %v1655 = vadd.f32 %v1617, 1e-06
    %v1656 = vadd.f32 %v1618, 1e-06
    %v1657 = vadd.f32 %v1619, 1e-06
    %v1658 = vadd.f32 %v1620, 1e-06
    %v1659 = vadd.f32 %v1621, 1e-06
    %v1660 = vadd.f32 %v1622, 1e-06
    %v1661 = vadd.f32 %v1623, 1e-06
    %v1662 = vadd.f32 %v1624, 1e-06
    %v1663 = vadd.f32 %v1625, 1e-06
    %v1664 = vadd.f32 %v1626, 1e-06
    %v1665 = vadd.f32 %v1627, 1e-06
    %v1666 = vadd.f32 %v1628, 1e-06
    %v1667 = vadd.f32 %v1629, 1e-06
    %v1668 = vadd.f32 %v1630, 1e-06
    %v1669 = vadd.f32 %v1631, 1e-06
    %v1670 = vadd.f32 %v1632, 1e-06
    %v1671 = vadd.f32 %v1633, 1e-06
    %v1672 = vadd.f32 %v1634, 1e-06
    %v1673 = vadd.f32 %v1635, 1e-06
    %v1674 = vadd.f32 %v1636, 1e-06
    %v1675 = vadd.f32 %v1637, 1e-06
    %v1676 = vadd.f32 %v1638, 1e-06
    %v1677 = vadd.f32 %v1639, 1e-06
    %v1678 = vadd.f32 %v1640, 1e-06
    %v1679 = vadd.f32 %v1641, 1e-06
    %v1680 = vadd.f32 %v1642, 1e-06
    %v1681 = vadd.f32 %v1643, 1e-06
    %v1682 = vadd.f32 %v1644, 1e-06
    %v1683 = vadd.f32 %v1645, 1e-06
    %v1684 = vrsqrt.pop %v1646
    %v1685 = vmul.f32 %v1684, %v1646
    %v1686 = vmul.f32 %v1685, %v1684
    %v1687 = vmul.f32 0.5, %v1686
    %v1688 = vsub.f32 1.5, %v1687
    %v1689 = vmul.f32 %v1684, %v1688
    %vm1690 = vweird.f32 %v1646
    %vm1691 = vweird.f32 %v1684
    %vm1692 = vmor %vm1690, %vm1691
    %v1693 = vsel %vm1692, %v1684, %v1689
    %v1694 = vrsqrt.pop %v1647
    %v1695 = vmul.f32 %v1694, %v1647
    %v1696 = vmul.f32 %v1695, %v1694
    %v1697 = vmul.f32 0.5, %v1696
    %v1698 = vsub.f32 1.5, %v1697
    %v1699 = vmul.f32 %v1694, %v1698
    %vm1700 = vweird.f32 %v1647
    %vm1701 = vweird.f32 %v1694
    %vm1702 = vmor %vm1700, %vm1701
    %v1703 = vsel %vm1702, %v1694, %v1699
    %v1704 = vrsqrt.pop %v1648
    %v1705 = vmul.f32 %v1704, %v1648
    %v1706 = vmul.f32 %v1705, %v1704
    %v1707 = vmul.f32 0.5, %v1706
    %v1708 = vsub.f32 1.5, %v1707
    %v1709 = vmul.f32 %v1704, %v1708
    %vm1710 = vweird.f32 %v1648
    %vm1711 = vweird.f32 %v1704
    %vm1712 = vmor %vm1710, %vm1711
    %v1713 = vsel %vm1712, %v1704, %v1709
    %v1714 = vrsqrt.pop %v1649
    %v1715 = vmul.f32 %v1714, %v1649
    %v1716 = vmul.f32 %v1715, %v1714
    %v1717 = vmul.f32 0.5, %v1716
    %v1718 = vsub.f32 1.5, %v1717
    %v1719 = vmul.f32 %v1714, %v1718
    %vm1720 = vweird.f32 %v1649
    %vm1721 = vweird.f32 %v1714
    %vm1722 = vmor %vm1720, %vm1721
    %v1723 = vsel %vm1722, %v1714, %v1719
    %v1724 = vrsqrt.pop %v1650
    %v1725 = vmul.f32 %v1724, %v1650
    %v1726 = vmul.f32 %v1725, %v1724
    %v1727 = vmul.f32 0.5, %v1726
    %v1728 = vsub.f32 1.5, %v1727
    %v1729 = vmul.f32 %v1724, %v1728
    %vm1730 = vweird.f32 %v1650
    %vm1731 = vweird.f32 %v1724
    %vm1732 = vmor %vm1730, %vm1731
    %v1733 = vsel %vm1732, %v1724, %v1729
    %v1734 = vrsqrt.pop %v1651
    %v1735 = vmul.f32 %v1734, %v1651
    %v1736 = vmul.f32 %v1735, %v1734
    %v1737 = vmul.f32 0.5, %v1736
    %v1738 = vsub.f32 1.5, %v1737
    %v1739 = vmul.f32 %v1734, %v1738
    %vm1740 = vweird.f32 %v1651
    %vm1741 = vweird.f32 %v1734
    %vm1742 = vmor %vm1740, %vm1741
    %v1743 = vsel %vm1742, %v1734, %v1739
    %v1744 = vrsqrt.pop %v1652
    %v1745 = vmul.f32 %v1744, %v1652
    %v1746 = vmul.f32 %v1745, %v1744
    %v1747 = vmul.f32 0.5, %v1746
    %v1748 = vsub.f32 1.5, %v1747
    %v1749 = vmul.f32 %v1744, %v1748
    %vm1750 = vweird.f32 %v1652
    %vm1751 = vweird.f32 %v1744
    %vm1752 = vmor %vm1750, %vm1751
    %v1753 = vsel %vm1752, %v1744, %v1749
    %v1754 = vrsqrt.pop %v1653
    %v1755 = vmul.f32 %v1754, %v1653
    %v1756 = vmul.f32 %v1755, %v1754
    %v1757 = vmul.f32 0.5, %v1756
    %v1758 = vsub.f32 1.5, %v1757
    %v1759 = vmul.f32 %v1754, %v1758
    %vm1760 = vweird.f32 %v1653
    %vm1761 = vweird.f32 %v1754
    %vm1762 = vmor %vm1760, %vm1761
    %v1763 = vsel %vm1762, %v1754, %v1759
    %v1764 = vrsqrt.pop %v1654
    %v1765 = vmul.f32 %v1764, %v1654
    %v1766 = vmul.f32 %v1765, %v1764
    %v1767 = vmul.f32 0.5, %v1766
    %v1768 = vsub.f32 1.5, %v1767
    %v1769 = vmul.f32 %v1764, %v1768
    %vm1770 = vweird.f32 %v1654
    %vm1771 = vweird.f32 %v1764
    %vm1772 = vmor %vm1770, %vm1771
    %v1773 = vsel %vm1772, %v1764, %v1769
    %v1774 = vrsqrt.pop %v1655
    %v1775 = vmul.f32 %v1774, %v1655
    %v1776 = vmul.f32 %v1775, %v1774
    %v1777 = vmul.f32 0.5, %v1776
    %v1778 = vsub.f32 1.5, %v1777
    %v1779 = vmul.f32 %v1774, %v1778
    %vm1780 = vweird.f32 %v1655
    %vm1781 = vweird.f32 %v1774
    %vm1782 = vmor %vm1780, %vm1781
    %v1783 = vsel %vm1782, %v1774, %v1779
    %v1784 = vrsqrt.pop %v1656
    %v1785 = vmul.f32 %v1784, %v1656
    %v1786 = vmul.f32 %v1785, %v1784
    %v1787 = vmul.f32 0.5, %v1786
    %v1788 = vsub.f32 1.5, %v1787
    %v1789 = vmul.f32 %v1784, %v1788
    %vm1790 = vweird.f32 %v1656
    %vm1791 = vweird.f32 %v1784
    %vm1792 = vmor %vm1790, %vm1791
    %v1793 = vsel %vm1792, %v1784, %v1789
    %v1794 = vrsqrt.pop %v1657
    %v1795 = vmul.f32 %v1794, %v1657
    %v1796 = vmul.f32 %v1795, %v1794
    %v1797 = vmul.f32 0.5, %v1796
    %v1798 = vsub.f32 1.5, %v1797
    %v1799 = vmul.f32 %v1794, %v1798
    %vm1800 = vweird.f32 %v1657
    %vm1801 = vweird.f32 %v1794
    %vm1802 = vmor %vm1800, %vm1801
    %v1803 = vsel %vm1802, %v1794, %v1799
    %v1804 = vrsqrt.pop %v1658
    %v1805 = vmul.f32 %v1804, %v1658
    %v1806 = vmul.f32 %v1805, %v1804
    %v1807 = vmul.f32 0.5, %v1806
    %v1808 = vsub.f32 1.5, %v1807
    %v1809 = vmul.f32 %v1804, %v1808
    %vm1810 = vweird.f32 %v1658
    %vm1811 = vweird.f32 %v1804
    %vm1812 = vmor %vm1810, %vm1811
    %v1813 = vsel %vm1812, %v1804, %v1809
    %v1814 = vrsqrt.pop %v1659
    %v1815 = vmul.f32 %v1814, %v1659
    %v1816 = vmul.f32 %v1815, %v1814
    %v1817 = vmul.f32 0.5, %v1816
    %v1818 = vsub.f32 1.5, %v1817
    %v1819 = vmul.f32 %v1814, %v1818
    %vm1820 = vweird.f32 %v1659
    %vm1821 = vweird.f32 %v1814
    %vm1822 = vmor %vm1820, %vm1821
    %v1823 = vsel %vm1822, %v1814, %v1819
    %v1824 = vrsqrt.pop %v1660
    %v1825 = vmul.f32 %v1824, %v1660
    %v1826 = vmul.f32 %v1825, %v1824
    %v1827 = vmul.f32 0.5, %v1826
    %v1828 = vsub.f32 1.5, %v1827
    %v1829 = vmul.f32 %v1824, %v1828
    %vm1830 = vweird.f32 %v1660
    %vm1831 = vweird.f32 %v1824
    %vm1832 = vmor %vm1830, %vm1831
    %v1833 = vsel %vm1832, %v1824, %v1829
    %v1834 = vrsqrt.pop %v1661
    %v1835 = vmul.f32 %v1834, %v1661
    %v1836 = vmul.f32 %v1835, %v1834
    %v1837 = vmul.f32 0.5, %v1836
    %v1838 = vsub.f32 1.5, %v1837
    %v1839 = vmul.f32 %v1834, %v1838
    %vm1840 = vweird.f32 %v1661
    %vm1841 = vweird.f32 %v1834
    %vm1842 = vmor %vm1840, %vm1841
    %v1843 = vsel %vm1842, %v1834, %v1839
    %v1844 = vrsqrt.pop %v1662
    %v1845 = vmul.f32 %v1844, %v1662
    %v1846 = vmul.f32 %v1845, %v1844
    %v1847 = vmul.f32 0.5, %v1846
    %v1848 = vsub.f32 1.5, %v1847
    %v1849 = vmul.f32 %v1844, %v1848
    %vm1850 = vweird.f32 %v1662
    %vm1851 = vweird.f32 %v1844
    %vm1852 = vmor %vm1850, %vm1851
    %v1853 = vsel %vm1852, %v1844, %v1849
    %v1854 = vrsqrt.pop %v1663
    %v1855 = vmul.f32 %v1854, %v1663
    %v1856 = vmul.f32 %v1855, %v1854
    %v1857 = vmul.f32 0.5, %v1856
    %v1858 = vsub.f32 1.5, %v1857
    %v1859 = vmul.f32 %v1854, %v1858
    %vm1860 = vweird.f32 %v1663
    %vm1861 = vweird.f32 %v1854
    %vm1862 = vmor %vm1860, %vm1861
    %v1863 = vsel %vm1862, %v1854, %v1859
    %v1864 = vrsqrt.pop %v1664
    %v1865 = vmul.f32 %v1864, %v1664
    %v1866 = vmul.f32 %v1865, %v1864
    %v1867 = vmul.f32 0.5, %v1866
    %v1868 = vsub.f32 1.5, %v1867
    %v1869 = vmul.f32 %v1864, %v1868
    %vm1870 = vweird.f32 %v1664
    %vm1871 = vweird.f32 %v1864
    %vm1872 = vmor %vm1870, %vm1871
    %v1873 = vsel %vm1872, %v1864, %v1869
    %v1874 = vrsqrt.pop %v1665
    %v1875 = vmul.f32 %v1874, %v1665
    %v1876 = vmul.f32 %v1875, %v1874
    %v1877 = vmul.f32 0.5, %v1876
    %v1878 = vsub.f32 1.5, %v1877
    %v1879 = vmul.f32 %v1874, %v1878
    %vm1880 = vweird.f32 %v1665
    %vm1881 = vweird.f32 %v1874
    %vm1882 = vmor %vm1880, %vm1881
    %v1883 = vsel %vm1882, %v1874, %v1879
    %v1884 = vrsqrt.pop %v1666
    %v1885 = vmul.f32 %v1884, %v1666
    %v1886 = vmul.f32 %v1885, %v1884
    %v1887 = vmul.f32 0.5, %v1886
    %v1888 = vsub.f32 1.5, %v1887
    %v1889 = vmul.f32 %v1884, %v1888
    %vm1890 = vweird.f32 %v1666
    %vm1891 = vweird.f32 %v1884
    %vm1892 = vmor %vm1890, %vm1891
    %v1893 = vsel %vm1892, %v1884, %v1889
    %v1894 = vrsqrt.pop %v1667
    %v1895 = vmul.f32 %v1894, %v1667
    %v1896 = vmul.f32 %v1895, %v1894
    %v1897 = vmul.f32 0.5, %v1896
    %v1898 = vsub.f32 1.5, %v1897
    %v1899 = vmul.f32 %v1894, %v1898
    %vm1900 = vweird.f32 %v1667
    %vm1901 = vweird.f32 %v1894
    %vm1902 = vmor %vm1900, %vm1901
    %v1903 = vsel %vm1902, %v1894, %v1899
    %v1904 = vrsqrt.pop %v1668
    %v1905 = vmul.f32 %v1904, %v1668
    %v1906 = vmul.f32 %v1905, %v1904
    %v1907 = vmul.f32 0.5, %v1906
    %v1908 = vsub.f32 1.5, %v1907
    %v1909 = vmul.f32 %v1904, %v1908
    %vm1910 = vweird.f32 %v1668
    %vm1911 = vweird.f32 %v1904
    %vm1912 = vmor %vm1910, %vm1911
    %v1913 = vsel %vm1912, %v1904, %v1909
    %v1914 = vrsqrt.pop %v1669
    %v1915 = vmul.f32 %v1914, %v1669
    %v1916 = vmul.f32 %v1915, %v1914
    %v1917 = vmul.f32 0.5, %v1916
    %v1918 = vsub.f32 1.5, %v1917
    %v1919 = vmul.f32 %v1914, %v1918
    %vm1920 = vweird.f32 %v1669
    %vm1921 = vweird.f32 %v1914
    %vm1922 = vmor %vm1920, %vm1921
    %v1923 = vsel %vm1922, %v1914, %v1919
    %v1924 = vrsqrt.pop %v1670
    %v1925 = vmul.f32 %v1924, %v1670
    %v1926 = vmul.f32 %v1925, %v1924
    %v1927 = vmul.f32 0.5, %v1926
    %v1928 = vsub.f32 1.5, %v1927
    %v1929 = vmul.f32 %v1924, %v1928
    %vm1930 = vweird.f32 %v1670
    %vm1931 = vweird.f32 %v1924
    %vm1932 = vmor %vm1930, %vm1931
    %v1933 = vsel %vm1932, %v1924, %v1929
    %v1934 = vrsqrt.pop %v1671
    %v1935 = vmul.f32 %v1934, %v1671
    %v1936 = vmul.f32 %v1935, %v1934
    %v1937 = vmul.f32 0.5, %v1936
    %v1938 = vsub.f32 1.5, %v1937
    %v1939 = vmul.f32 %v1934, %v1938
    %vm1940 = vweird.f32 %v1671
    %vm1941 = vweird.f32 %v1934
    %vm1942 = vmor %vm1940, %vm1941
    %v1943 = vsel %vm1942, %v1934, %v1939
    %v1944 = vrsqrt.pop %v1672
    %v1945 = vmul.f32 %v1944, %v1672
    %v1946 = vmul.f32 %v1945, %v1944
    %v1947 = vmul.f32 0.5, %v1946
    %v1948 = vsub.f32 1.5, %v1947
    %v1949 = vmul.f32 %v1944, %v1948
    %vm1950 = vweird.f32 %v1672
    %vm1951 = vweird.f32 %v1944
    %vm1952 = vmor %vm1950, %vm1951
    %v1953 = vsel %vm1952, %v1944, %v1949
    %v1954 = vrsqrt.pop %v1673
    %v1955 = vmul.f32 %v1954, %v1673
    %v1956 = vmul.f32 %v1955, %v1954
    %v1957 = vmul.f32 0.5, %v1956
    %v1958 = vsub.f32 1.5, %v1957
    %v1959 = vmul.f32 %v1954, %v1958
    %vm1960 = vweird.f32 %v1673
    %vm1961 = vweird.f32 %v1954
    %vm1962 = vmor %vm1960, %vm1961
    %v1963 = vsel %vm1962, %v1954, %v1959
    %v1964 = vrsqrt.pop %v1674
    %v1965 = vmul.f32 %v1964, %v1674
    %v1966 = vmul.f32 %v1965, %v1964
    %v1967 = vmul.f32 0.5, %v1966
    %v1968 = vsub.f32 1.5, %v1967
    %v1969 = vmul.f32 %v1964, %v1968
    %vm1970 = vweird.f32 %v1674
    %vm1971 = vweird.f32 %v1964
    %vm1972 = vmor %vm1970, %vm1971
    %v1973 = vsel %vm1972, %v1964, %v1969
    %v1974 = vrsqrt.pop %v1675
    %v1975 = vmul.f32 %v1974, %v1675
    %v1976 = vmul.f32 %v1975, %v1974
    %v1977 = vmul.f32 0.5, %v1976
    %v1978 = vsub.f32 1.5, %v1977
    %v1979 = vmul.f32 %v1974, %v1978
    %vm1980 = vweird.f32 %v1675
    %vm1981 = vweird.f32 %v1974
    %vm1982 = vmor %vm1980, %vm1981
    %v1983 = vsel %vm1982, %v1974, %v1979
    %v1984 = vrsqrt.pop %v1676
    %v1985 = vmul.f32 %v1984, %v1676
    %v1986 = vmul.f32 %v1985, %v1984
    %v1987 = vmul.f32 0.5, %v1986
    %v1988 = vsub.f32 1.5, %v1987
    %v1989 = vmul.f32 %v1984, %v1988
    %vm1990 = vweird.f32 %v1676
    %vm1991 = vweird.f32 %v1984
    %vm1992 = vmor %vm1990, %vm1991
    %v1993 = vsel %vm1992, %v1984, %v1989
    %v1994 = vrsqrt.pop %v1677
    %v1995 = vmul.f32 %v1994, %v1677
    %v1996 = vmul.f32 %v1995, %v1994
    %v1997 = vmul.f32 0.5, %v1996
    %v1998 = vsub.f32 1.5, %v1997
    %v1999 = vmul.f32 %v1994, %v1998
    %vm2000 = vweird.f32 %v1677
    %vm2001 = vweird.f32 %v1994
    %vm2002 = vmor %vm2000, %vm2001
    %v2003 = vsel %vm2002, %v1994, %v1999
    %v2004 = vrsqrt.pop %v1678
    %v2005 = vmul.f32 %v2004, %v1678
    %v2006 = vmul.f32 %v2005, %v2004
    %v2007 = vmul.f32 0.5, %v2006
    %v2008 = vsub.f32 1.5, %v2007
    %v2009 = vmul.f32 %v2004, %v2008
    %vm2010 = vweird.f32 %v1678
    %vm2011 = vweird.f32 %v2004
    %vm2012 = vmor %vm2010, %vm2011
    %v2013 = vsel %vm2012, %v2004, %v2009
    %v2014 = vrsqrt.pop %v1679
    %v2015 = vmul.f32 %v2014, %v1679
    %v2016 = vmul.f32 %v2015, %v2014
    %v2017 = vmul.f32 0.5, %v2016
    %v2018 = vsub.f32 1.5, %v2017
    %v2019 = vmul.f32 %v2014, %v2018
    %vm2020 = vweird.f32 %v1679
    %vm2021 = vweird.f32 %v2014
    %vm2022 = vmor %vm2020, %vm2021
    %v2023 = vsel %vm2022, %v2014, %v2019
    %v2024 = vrsqrt.pop %v1680
    %v2025 = vmul.f32 %v2024, %v1680
    %v2026 = vmul.f32 %v2025, %v2024
    %v2027 = vmul.f32 0.5, %v2026
    %v2028 = vsub.f32 1.5, %v2027
    %v2029 = vmul.f32 %v2024, %v2028
    %vm2030 = vweird.f32 %v1680
    %vm2031 = vweird.f32 %v2024
    %vm2032 = vmor %vm2030, %vm2031
    %v2033 = vsel %vm2032, %v2024, %v2029
    %v2034 = vrsqrt.pop %v1681
    %v2035 = vmul.f32 %v2034, %v1681
    %v2036 = vmul.f32 %v2035, %v2034
    %v2037 = vmul.f32 0.5, %v2036
    %v2038 = vsub.f32 1.5, %v2037
    %v2039 = vmul.f32 %v2034, %v2038
    %vm2040 = vweird.f32 %v1681
    %vm2041 = vweird.f32 %v2034
    %vm2042 = vmor %vm2040, %vm2041
    %v2043 = vsel %vm2042, %v2034, %v2039
    %v2044 = vrsqrt.pop %v1682
    %v2045 = vmul.f32 %v2044, %v1682
    %v2046 = vmul.f32 %v2045, %v2044
    %v2047 = vmul.f32 0.5, %v2046
    %v2048 = vsub.f32 1.5, %v2047
    %v2049 = vmul.f32 %v2044, %v2048
    %vm2050 = vweird.f32 %v1682
    %vm2051 = vweird.f32 %v2044
    %vm2052 = vmor %vm2050, %vm2051
    %v2053 = vsel %vm2052, %v2044, %v2049
    %v2054 = vrsqrt.pop %v1683
    %v2055 = vmul.f32 %v2054, %v1683
    %v2056 = vmul.f32 %v2055, %v2054
    %v2057 = vmul.f32 0.5, %v2056
    %v2058 = vsub.f32 1.5, %v2057
    %v2059 = vmul.f32 %v2054, %v2058
    %vm2060 = vweird.f32 %v1683
    %vm2061 = vweird.f32 %v2054
    %vm2062 = vmor %vm2060, %vm2061
    %v2063 = vsel %vm2062, %v2054, %v2059
    %v2064 = vmul.f32 %v1418, %v1693
    %v2065 = vmul.f32 %v1419, %v1703
    %v2066 = vmul.f32 %v1420, %v1713
    %v2067 = vmul.f32 %v1421, %v1723
    %v2068 = vmul.f32 %v1422, %v1733
    %v2069 = vmul.f32 %v1423, %v1743
    %v2070 = vmul.f32 %v1424, %v1753
    %v2071 = vmul.f32 %v1425, %v1763
    %v2072 = vmul.f32 %v1426, %v1773
    %v2073 = vmul.f32 %v1427, %v1783
    %v2074 = vmul.f32 %v1428, %v1793
    %v2075 = vmul.f32 %v1429, %v1803
    %v2076 = vmul.f32 %v1430, %v1813
    %v2077 = vmul.f32 %v1431, %v1823
    %v2078 = vmul.f32 %v1432, %v1833
    %v2079 = vmul.f32 %v1433, %v1843
    %v2080 = vmul.f32 %v1434, %v1853
    %v2081 = vmul.f32 %v1435, %v1863
    %v2082 = vmul.f32 %v1436, %v1873
    %v2083 = vmul.f32 %v1437, %v1883
    %v2084 = vmul.f32 %v1438, %v1893
    %v2085 = vmul.f32 %v1439, %v1903
    %v2086 = vmul.f32 %v1440, %v1913
    %v2087 = vmul.f32 %v1441, %v1923
    %v2088 = vmul.f32 %v1442, %v1933
    %v2089 = vmul.f32 %v1443, %v1943
    %v2090 = vmul.f32 %v1444, %v1953
    %v2091 = vmul.f32 %v1445, %v1963
    %v2092 = vmul.f32 %v1446, %v1973
    %v2093 = vmul.f32 %v1447, %v1983
    %v2094 = vmul.f32 %v1448, %v1993
    %v2095 = vmul.f32 %v1449, %v2003
    %v2096 = vmul.f32 %v1450, %v2013
    %v2097 = vmul.f32 %v1451, %v2023
    %v2098 = vmul.f32 %v1452, %v2033
    %v2099 = vmul.f32 %v1453, %v2043
    %v2100 = vmul.f32 %v1454, %v2053
    %v2101 = vmul.f32 %v1455, %v2063
    %v2102 = vadd.f32 %v1146, 1.0
    %v2103 = vadd.f32 %v1149, 1.0
    %v2104 = vadd.f32 %v1152, 1.0
    %v2105 = vadd.f32 %v1155, 1.0
    %v2106 = vadd.f32 %v1158, 1.0
    %v2107 = vadd.f32 %v1161, 1.0
    %v2108 = vadd.f32 %v1164, 1.0
    %v2109 = vadd.f32 %v1167, 1.0
    %v2110 = vadd.f32 %v1170, 1.0
    %v2111 = vadd.f32 %v1173, 1.0
    %v2112 = vadd.f32 %v1176, 1.0
    %v2113 = vadd.f32 %v1179, 1.0
    %v2114 = vadd.f32 %v1182, 1.0
    %v2115 = vadd.f32 %v1185, 1.0
    %v2116 = vadd.f32 %v1188, 1.0
    %v2117 = vadd.f32 %v1191, 1.0
    %v2118 = vadd.f32 %v1194, 1.0
    %v2119 = vadd.f32 %v1197, 1.0
    %v2120 = vadd.f32 %v1200, 1.0
    %v2121 = vadd.f32 %v1203, 1.0
    %v2122 = vadd.f32 %v1206, 1.0
    %v2123 = vadd.f32 %v1209, 1.0
    %v2124 = vadd.f32 %v1212, 1.0
    %v2125 = vadd.f32 %v1215, 1.0
    %v2126 = vadd.f32 %v1218, 1.0
    %v2127 = vadd.f32 %v1221, 1.0
    %v2128 = vadd.f32 %v1224, 1.0
    %v2129 = vadd.f32 %v1227, 1.0
    %v2130 = vadd.f32 %v1230, 1.0
    %v2131 = vadd.f32 %v1233, 1.0
    %v2132 = vadd.f32 %v1236, 1.0
    %v2133 = vadd.f32 %v1239, 1.0
    %v2134 = vadd.f32 %v1242, 1.0
    %v2135 = vadd.f32 %v1245, 1.0
    %v2136 = vadd.f32 %v1248, 1.0
    %v2137 = vadd.f32 %v1251, 1.0
    %v2138 = vadd.f32 %v1254, 1.0
    %v2139 = vadd.f32 %v1257, 1.0
    %v2140 = vmul.f32 %v2064, %v2102
    %v2141 = vmul.f32 %v2065, %v2103
    %v2142 = vmul.f32 %v2066, %v2104
    %v2143 = vmul.f32 %v2067, %v2105
    %v2144 = vmul.f32 %v2068, %v2106
    %v2145 = vmul.f32 %v2069, %v2107
    %v2146 = vmul.f32 %v2070, %v2108
    %v2147 = vmul.f32 %v2071, %v2109
    %v2148 = vmul.f32 %v2072, %v2110
    %v2149 = vmul.f32 %v2073, %v2111
    %v2150 = vmul.f32 %v2074, %v2112
    %v2151 = vmul.f32 %v2075, %v2113
    %v2152 = vmul.f32 %v2076, %v2114
    %v2153 = vmul.f32 %v2077, %v2115
    %v2154 = vmul.f32 %v2078, %v2116
    %v2155 = vmul.f32 %v2079, %v2117
    %v2156 = vmul.f32 %v2080, %v2118
    %v2157 = vmul.f32 %v2081, %v2119
    %v2158 = vmul.f32 %v2082, %v2120
    %v2159 = vmul.f32 %v2083, %v2121
    %v2160 = vmul.f32 %v2084, %v2122
    %v2161 = vmul.f32 %v2085, %v2123
    %v2162 = vmul.f32 %v2086, %v2124
    %v2163 = vmul.f32 %v2087, %v2125
    %v2164 = vmul.f32 %v2088, %v2126
    %v2165 = vmul.f32 %v2089, %v2127
    %v2166 = vmul.f32 %v2090, %v2128
    %v2167 = vmul.f32 %v2091, %v2129
    %v2168 = vmul.f32 %v2092, %v2130
    %v2169 = vmul.f32 %v2093, %v2131
    %v2170 = vmul.f32 %v2094, %v2132
    %v2171 = vmul.f32 %v2095, %v2133
    %v2172 = vmul.f32 %v2096, %v2134
    %v2173 = vmul.f32 %v2097, %v2135
    %v2174 = vmul.f32 %v2098, %v2136
    %v2175 = vmul.f32 %v2099, %v2137
    %v2176 = vmul.f32 %v2100, %v2138
    %v2177 = vmul.f32 %v2101, %v2139
    %v2178 = vadd.f32 %v2140, %v1007
    %v2179 = vadd.f32 %v2141, %v1010
    %v2180 = vadd.f32 %v2142, %v1013
    %v2181 = vadd.f32 %v2143, %v1016
    %v2182 = vadd.f32 %v2144, %v1019
    %v2183 = vadd.f32 %v2145, %v1022
    %v2184 = vadd.f32 %v2146, %v1025
    %v2185 = vadd.f32 %v2147, %v1028
    %v2186 = vadd.f32 %v2148, %v1031
    %v2187 = vadd.f32 %v2149, %v1034
    %v2188 = vadd.f32 %v2150, %v1037
    %v2189 = vadd.f32 %v2151, %v1040
    %v2190 = vadd.f32 %v2152, %v1043
    %v2191 = vadd.f32 %v2153, %v1046
    %v2192 = vadd.f32 %v2154, %v1049
    %v2193 = vadd.f32 %v2155, %v1052
    %v2194 = vadd.f32 %v2156, %v1055
    %v2195 = vadd.f32 %v2157, %v1058
    %v2196 = vadd.f32 %v2158, %v1061
    %v2197 = vadd.f32 %v2159, %v1064
    %v2198 = vadd.f32 %v2160, %v1067
    %v2199 = vadd.f32 %v2161, %v1070
    %v2200 = vadd.f32 %v2162, %v1073
    %v2201 = vadd.f32 %v2163, %v1076
    %v2202 = vadd.f32 %v2164, %v1079
    %v2203 = vadd.f32 %v2165, %v1082
    %v2204 = vadd.f32 %v2166, %v1085
    %v2205 = vadd.f32 %v2167, %v1088
    %v2206 = vadd.f32 %v2168, %v1091
    %v2207 = vadd.f32 %v2169, %v1094
    %v2208 = vadd.f32 %v2170, %v1097
    %v2209 = vadd.f32 %v2171, %v1100
    %v2210 = vadd.f32 %v2172, %v1103
    %v2211 = vadd.f32 %v2173, %v1106
    %v2212 = vadd.f32 %v2174, %v1109
    %v2213 = vadd.f32 %v2175, %v1112
    %v2214 = vadd.f32 %v2176, %v1115
    %v2215 = vadd.f32 %v2177, %v1118
    %v2216 = vld [vmem:[%s6] sm:$0xff]
    %v2217 = vld [vmem:[%s6 + $0x8] sm:$0xff]
    %v2218 = vld [vmem:[%s6 + $0x10] sm:$0xff]
    %v2219 = vld [vmem:[%s6 + $0x18] sm:$0xff]
    %v2220 = vld [vmem:[%s7] sm:$0x1]
    %v2222 = vperm.slane %v2220, 0
    %v2225 = vsel %vm874, %v2178, 0
    %v2228 = vsel %vm874, %v2179, 0
    %v2231 = vsel %vm874, %v2180, 0
    %v2234 = vsel %vm874, %v2181, 0
    %v2237 = vsel %vm874, %v2182, 0
    %v2240 = vsel %vm874, %v2183, 0
    %v2243 = vsel %vm874, %v2184, 0
    %v2246 = vsel %vm874, %v2185, 0
    %v2249 = vsel %vm874, %v2186, 0
    %v2252 = vsel %vm874, %v2187, 0
    %v2255 = vsel %vm874, %v2188, 0
    %v2258 = vsel %vm874, %v2189, 0
    %v2261 = vsel %vm874, %v2190, 0
    %v2264 = vsel %vm874, %v2191, 0
    %v2267 = vsel %vm874, %v2192, 0
    %v2270 = vsel %vm874, %v2193, 0
    %v2273 = vsel %vm874, %v2194, 0
    %v2276 = vsel %vm874, %v2195, 0
    %v2279 = vsel %vm874, %v2196, 0
    %v2282 = vsel %vm874, %v2197, 0
    %v2285 = vsel %vm874, %v2198, 0
    %v2288 = vsel %vm874, %v2199, 0
    %v2291 = vsel %vm874, %v2200, 0
    %v2294 = vsel %vm874, %v2201, 0
    %v2297 = vsel %vm874, %v2202, 0
    %v2300 = vsel %vm874, %v2203, 0
    %v2303 = vsel %vm874, %v2204, 0
    %v2306 = vsel %vm874, %v2205, 0
    %v2309 = vsel %vm874, %v2206, 0
    %v2312 = vsel %vm874, %v2207, 0
    %v2315 = vsel %vm874, %v2208, 0
    %v2318 = vsel %vm874, %v2209, 0
    %v2321 = vsel %vm874, %v2210, 0
    %v2324 = vsel %vm874, %v2211, 0
    %v2327 = vsel %vm874, %v2212, 0
    %v2330 = vsel %vm874, %v2213, 0
    %v2333 = vsel %vm874, %v2214, 0
    %v2336 = vsel %vm874, %v2215, 0
    %2338 = vmatpush.msra.mxu0 0.0
    %2339 = vmatpush.msra.mxu0 0.0
    %2340 = vmatpush.msra.mxu0 0.0
    %2341 = vmatpush.msra.mxu0 0.0
    %2342 = vmatpush.msra.mxu0 0.0
    %2343 = vmatpush.msra.mxu0 0.0
    %2344 = vmatpush.msra.mxu0 0.0
    %2345 = vmatpush.msra.mxu0 0.0
    %2346 = vmatpush.msra.mxu0 0.0
    %2347 = vmatpush.msra.mxu0 0.0
    %2348 = vmatpush.msra.mxu0 0.0
    %2349 = vmatpush.msra.mxu0 0.0
    %2350 = vmatpush.msra.mxu0 %v2219
    %2351 = vmatpush.msra.mxu0 %v2218
    %2352 = vmatpush.msra.mxu0 %v2217
    %2353 = vmatpush.msra.mxu0 %v2216
    %2354 = vmatmul.f32.gmra.mxu0 %v2225
    %v2355 = vpop.f32.mrf.mxu0
    %v2356 = vadd.f32 %v2222, %v2355
    %2357 = vmatmul.f32.gmra.mxu0 %v2228
    %v2358 = vpop.f32.mrf.mxu0
    %v2359 = vadd.f32 %v2222, %v2358
    %2360 = vmatmul.f32.gmra.mxu0 %v2231
    %v2361 = vpop.f32.mrf.mxu0
    %v2362 = vadd.f32 %v2222, %v2361
    %2363 = vmatmul.f32.gmra.mxu0 %v2234
    %v2364 = vpop.f32.mrf.mxu0
    %v2365 = vadd.f32 %v2222, %v2364
    %2366 = vmatmul.f32.gmra.mxu0 %v2237
    %v2367 = vpop.f32.mrf.mxu0
    %v2368 = vadd.f32 %v2222, %v2367
    %2369 = vmatmul.f32.gmra.mxu0 %v2240
    %v2370 = vpop.f32.mrf.mxu0
    %v2371 = vadd.f32 %v2222, %v2370
    %2372 = vmatmul.f32.gmra.mxu0 %v2243
    %v2373 = vpop.f32.mrf.mxu0
    %v2374 = vadd.f32 %v2222, %v2373
    %2375 = vmatmul.f32.gmra.mxu0 %v2246
    %v2376 = vpop.f32.mrf.mxu0
    %v2377 = vadd.f32 %v2222, %v2376
    %2378 = vmatmul.f32.gmra.mxu0 %v2249
    %v2379 = vpop.f32.mrf.mxu0
    %v2380 = vadd.f32 %v2222, %v2379
    %2381 = vmatmul.f32.gmra.mxu0 %v2252
    %v2382 = vpop.f32.mrf.mxu0
    %v2383 = vadd.f32 %v2222, %v2382
    %2384 = vmatmul.f32.gmra.mxu0 %v2255
    %v2385 = vpop.f32.mrf.mxu0
    %v2386 = vadd.f32 %v2222, %v2385
    %2387 = vmatmul.f32.gmra.mxu0 %v2258
    %v2388 = vpop.f32.mrf.mxu0
    %v2389 = vadd.f32 %v2222, %v2388
    %2390 = vmatmul.f32.gmra.mxu0 %v2261
    %v2391 = vpop.f32.mrf.mxu0
    %v2392 = vadd.f32 %v2222, %v2391
    %2393 = vmatmul.f32.gmra.mxu0 %v2264
    %v2394 = vpop.f32.mrf.mxu0
    %v2395 = vadd.f32 %v2222, %v2394
    %2396 = vmatmul.f32.gmra.mxu0 %v2267
    %v2397 = vpop.f32.mrf.mxu0
    %v2398 = vadd.f32 %v2222, %v2397
    %2399 = vmatmul.f32.gmra.mxu0 %v2270
    %v2400 = vpop.f32.mrf.mxu0
    %v2401 = vadd.f32 %v2222, %v2400
    %2402 = vmatmul.f32.gmra.mxu0 %v2273
    %v2403 = vpop.f32.mrf.mxu0
    %v2404 = vadd.f32 %v2222, %v2403
    %2405 = vmatmul.f32.gmra.mxu0 %v2276
    %v2406 = vpop.f32.mrf.mxu0
    %v2407 = vadd.f32 %v2222, %v2406
    %2408 = vmatmul.f32.gmra.mxu0 %v2279
    %v2409 = vpop.f32.mrf.mxu0
    %v2410 = vadd.f32 %v2222, %v2409
    %2411 = vmatmul.f32.gmra.mxu0 %v2282
    %v2412 = vpop.f32.mrf.mxu0
    %v2413 = vadd.f32 %v2222, %v2412
    %2414 = vmatmul.f32.gmra.mxu0 %v2285
    %v2415 = vpop.f32.mrf.mxu0
    %v2416 = vadd.f32 %v2222, %v2415
    %2417 = vmatmul.f32.gmra.mxu0 %v2288
    %v2418 = vpop.f32.mrf.mxu0
    %v2419 = vadd.f32 %v2222, %v2418
    %2420 = vmatmul.f32.gmra.mxu0 %v2291
    %v2421 = vpop.f32.mrf.mxu0
    %v2422 = vadd.f32 %v2222, %v2421
    %2423 = vmatmul.f32.gmra.mxu0 %v2294
    %v2424 = vpop.f32.mrf.mxu0
    %v2425 = vadd.f32 %v2222, %v2424
    %2426 = vmatmul.f32.gmra.mxu0 %v2297
    %v2427 = vpop.f32.mrf.mxu0
    %v2428 = vadd.f32 %v2222, %v2427
    %2429 = vmatmul.f32.gmra.mxu0 %v2300
    %v2430 = vpop.f32.mrf.mxu0
    %v2431 = vadd.f32 %v2222, %v2430
    %2432 = vmatmul.f32.gmra.mxu0 %v2303
    %v2433 = vpop.f32.mrf.mxu0
    %v2434 = vadd.f32 %v2222, %v2433
    %2435 = vmatmul.f32.gmra.mxu0 %v2306
    %v2436 = vpop.f32.mrf.mxu0
    %v2437 = vadd.f32 %v2222, %v2436
    %2438 = vmatmul.f32.gmra.mxu0 %v2309
    %v2439 = vpop.f32.mrf.mxu0
    %v2440 = vadd.f32 %v2222, %v2439
    %2441 = vmatmul.f32.gmra.mxu0 %v2312
    %v2442 = vpop.f32.mrf.mxu0
    %v2443 = vadd.f32 %v2222, %v2442
    %2444 = vmatmul.f32.gmra.mxu0 %v2315
    %v2445 = vpop.f32.mrf.mxu0
    %v2446 = vadd.f32 %v2222, %v2445
    %2447 = vmatmul.f32.gmra.mxu0 %v2318
    %v2448 = vpop.f32.mrf.mxu0
    %v2449 = vadd.f32 %v2222, %v2448
    %2450 = vmatmul.f32.gmra.mxu0 %v2321
    %v2451 = vpop.f32.mrf.mxu0
    %v2452 = vadd.f32 %v2222, %v2451
    %2453 = vmatmul.f32.gmra.mxu0 %v2324
    %v2454 = vpop.f32.mrf.mxu0
    %v2455 = vadd.f32 %v2222, %v2454
    %2456 = vmatmul.f32.gmra.mxu0 %v2327
    %v2457 = vpop.f32.mrf.mxu0
    %v2458 = vadd.f32 %v2222, %v2457
    %2459 = vmatmul.f32.gmra.mxu0 %v2330
    %v2460 = vpop.f32.mrf.mxu0
    %v2461 = vadd.f32 %v2222, %v2460
    %2462 = vmatmul.f32.gmra.mxu0 %v2333
    %v2463 = vpop.f32.mrf.mxu0
    %v2464 = vadd.f32 %v2222, %v2463
    %2465 = vmatmul.f32.gmra.mxu0 %v2336
    %v2466 = vpop.f32.mrf.mxu0
    %v2467 = vadd.f32 %v2222, %v2466
    %2468 = vdwg.mxu0
    %2469 = vst [vmem:[#allocation2] sm:$0xff] %v2356
    %2470 = vst [vmem:[#allocation2 + $0x8] sm:$0xff] %v2359
    %2471 = vst [vmem:[#allocation2 + $0x10] sm:$0xff] %v2362
    %2472 = vst [vmem:[#allocation2 + $0x18] sm:$0xff] %v2365
    %2473 = vst [vmem:[#allocation2 + $0x20] sm:$0xff] %v2368
    %2474 = vst [vmem:[#allocation2 + $0x28] sm:$0xff] %v2371
    %2475 = vst [vmem:[#allocation2 + $0x30] sm:$0xff] %v2374
    %2476 = vst [vmem:[#allocation2 + $0x38] sm:$0xff] %v2377
    %2477 = vst [vmem:[#allocation2 + $0x40] sm:$0xff] %v2380
    %2478 = vst [vmem:[#allocation2 + $0x48] sm:$0xff] %v2383
    %2479 = vst [vmem:[#allocation2 + $0x50] sm:$0xff] %v2386
    %2480 = vst [vmem:[#allocation2 + $0x58] sm:$0xff] %v2389
    %2481 = vst [vmem:[#allocation2 + $0x60] sm:$0xff] %v2392
    %2482 = vst [vmem:[#allocation2 + $0x68] sm:$0xff] %v2395
    %2483 = vst [vmem:[#allocation2 + $0x70] sm:$0xff] %v2398
    %2484 = vst [vmem:[#allocation2 + $0x78] sm:$0xff] %v2401
    %2485 = vst [vmem:[#allocation2 + $0x80] sm:$0xff] %v2404
    %2486 = vst [vmem:[#allocation2 + $0x88] sm:$0xff] %v2407
    %2487 = vst [vmem:[#allocation2 + $0x90] sm:$0xff] %v2410
    %2488 = vst [vmem:[#allocation2 + $0x98] sm:$0xff] %v2413
    %2489 = vst [vmem:[#allocation2 + $0xa0] sm:$0xff] %v2416
    %2490 = vst [vmem:[#allocation2 + $0xa8] sm:$0xff] %v2419
    %2491 = vst [vmem:[#allocation2 + $0xb0] sm:$0xff] %v2422
    %2492 = vst [vmem:[#allocation2 + $0xb8] sm:$0xff] %v2425
    %2493 = vst [vmem:[#allocation2 + $0xc0] sm:$0xff] %v2428
    %2494 = vst [vmem:[#allocation2 + $0xc8] sm:$0xff] %v2431
    %2495 = vst [vmem:[#allocation2 + $0xd0] sm:$0xff] %v2434
    %2496 = vst [vmem:[#allocation2 + $0xd8] sm:$0xff] %v2437
    %2497 = vst [vmem:[#allocation2 + $0xe0] sm:$0xff] %v2440
    %2498 = vst [vmem:[#allocation2 + $0xe8] sm:$0xff] %v2443
    %2499 = vst [vmem:[#allocation2 + $0xf0] sm:$0xff] %v2446
    %2500 = vst [vmem:[#allocation2 + $0xf8] sm:$0xff] %v2449
    %2501 = vst [vmem:[#allocation2 + $0x100] sm:$0xff] %v2452
    %2502 = vst [vmem:[#allocation2 + $0x108] sm:$0xff] %v2455
    %2503 = vst [vmem:[#allocation2 + $0x110] sm:$0xff] %v2458
    %2504 = vst [vmem:[#allocation2 + $0x118] sm:$0xff] %v2461
    %2505 = vst [vmem:[#allocation2 + $0x120] sm:$0xff] %v2464
    %2506 = vst [vmem:[#allocation2 + $0x128] sm:$0xff] %v2467
    // Predicated region
    $region34: #{tpu_custom_call.1} parent=1 // pred_check
      _
    $region35: #{tpu_custom_call.1} parent=1 // pred_check_branch
      %2508 = sbr.rel (0) target = $region37
    $region36: #{tpu_custom_call.1} parent=1 // pred_region
      %2510 = vsyncadd [#allocation3], 0
      %s2511 = sshll.u32 [#allocation2], 4
      %s2512 = int_to_ptr.vmem [resolvable:$true] %s2511
      %s2513 = sshll.u32 %s8, 4
      %s2514 = int_to_ptr.hbm [resolvable:$true] %s2513
      %2519 = dma.vmem_to_hbm [thread:$0]  %s2512, 4864, %s2514, [#allocation3], 128, 128, 8
    $region37: #{tpu_custom_call.1} parent=1 // pred_fallthru
      _
    // Predicated region
    $region38: #{tpu_custom_call.1} parent=1 // pred_check
      _
    $region39: #{tpu_custom_call.1} parent=1 // pred_check_branch
      %2521 = sbr.rel (0) target = $region41
    $region40: #{tpu_custom_call.1} parent=1 // pred_region
      %2523 = dma.done [#allocation3], 4864
    $region41: #{tpu_custom_call.1} parent=1 // pred_fallthru
      _
    %2524 = vsyncpa [#allocation3], 1

</llo_original>
